<compile_context>
chip_gen: v7x
topology: tpu7x:2x2x1
jax: 0.10.0
libtpu: 0.0.40
codegen_flags: <defaults>
</compile_context>

<pallas_src>
import functools
import math

import jax
import jax.numpy as jnp
from jax.experimental import pallas as pl
from jax.experimental.pallas import tpu as pltpu


def _attention_kernel(xq_ref, xv_ref, wq_ref, bq_ref, wv_ref, bv_ref,
                      wmk_ref, pos_ref, wo_ref, bo_ref, o_ref,
                      *, heads, dim_key, dim_value):
    xq = xq_ref[0]                                       # (C, TN) bf16 : query-tile columns
    xv = xv_ref[0]                                       # (C, N)  bf16 : all key columns

    # 1x1-conv projections (+ folded BN), bf16 MXU with f32 accumulation.
    # q is only needed at this query tile; v is needed at every key position.
    q_all = jnp.dot(wq_ref[...], xq, preferred_element_type=jnp.float32) + bq_ref[...]   # (H*Dk, TN)
    v_all = jnp.dot(wv_ref[...], xv, preferred_element_type=jnp.float32) + bv_ref[...]   # (H*Dv, N)

    w_mk = wmk_ref[...]                                  # (N, Dk) f32, mk-BN scale folded

    y = None
    for h in range(heads):                               # static unroll (H is small)
        qh = q_all[h * dim_key:(h + 1) * dim_key, :]     # (Dk, TN) sublane slice (cheap)
        # scores^T[j, i]: mk Linear + folded mk-BN + pos bias (shift folded in).
        # Kept in f32 -- this matmul feeds exp() (accuracy-critical, not perf-critical).
        dots = jnp.dot(w_mk, qh, preferred_element_type=jnp.float32) + pos_ref[h]        # (N_j, TN_i)
        # softmax over j (axis 0); divide goes to the EUP via approx reciprocal
        dots = dots - jnp.max(dots, axis=0, keepdims=True)
        e = jnp.exp(dots)
        attn = e * pl.reciprocal(jnp.sum(e, axis=0, keepdims=True), approx=True)
        vh = v_all[h * dim_value:(h + 1) * dim_value, :].astype(jnp.bfloat16)             # (Dv, N_j)
        # out_h^T = v_h^T @ attn^T (bf16 MXU, f32 acc); per-head ReLU == ReLU on concat
        oh = jnp.maximum(
            jnp.dot(vh, attn.astype(jnp.bfloat16), preferred_element_type=jnp.float32),
            0.0)                                          # (Dv, TN_i)
        # accumulate directly through this head's (out-BN-scaled) slice of w_out
        contrib = jnp.dot(wo_ref[h], oh.astype(jnp.bfloat16),
                          preferred_element_type=jnp.float32)                             # (dim_out, TN_i)
        y = contrib if y is None else y + contrib

    o_ref[0] = y + bo_ref[...]                            # folded conv bias + out-BN shift


def attention_diy_pallas(x_nchw, params, *, heads, dim_key, dim_value):
    B, C, F, _ = x_nchw.shape
    N = F * F
    dim_out = params["w_out"].shape[1]
    TN = 128 if N % 128 == 0 else N      # query-position tile (keeps output stores lane-dense)
    num_t = N // TN

    x = x_nchw.reshape(B, C, N).astype(jnp.bfloat16)   # pure reshape (no transpose); bf16 MXU feed

    # ---- host-side constant folding / re-layout / casts (one time, outside kernel) ----
    w_qT = params["w_q"].T.astype(jnp.bfloat16)               # (H*Dk, C)
    b_qT = params["b_q"].reshape(-1, 1)                       # (H*Dk, 1) f32
    w_vT = params["w_v"].T.astype(jnp.bfloat16)               # (H*Dv, C)
    b_vT = params["b_v"].reshape(-1, 1)                       # (H*Dv, 1) f32
    w_mkT = (params["w_mk"] * params["mk_scale"]).T           # (N, Dk) f32, mk-BN scale folded
    pos_T = (jnp.transpose(params["pos_bias"], (0, 2, 1))     # (H, N_j, N_i)
             + params["mk_shift"].reshape(1, N, 1)            #   mk-BN shift folded
             ).astype(jnp.bfloat16)                           # bf16: largest operand, halves DMA
    w_out_s = params["w_out"] * params["out_bn_scale"]        # (H*Dv, dim_out) out-BN scale folded
    w_oT = w_out_s.reshape(heads, dim_value, dim_out).transpose(0, 2, 1).astype(jnp.bfloat16)
    b_oT = (params["b_out"] * params["out_bn_scale"]
            + params["out_bn_shift"]).reshape(-1, 1)          # (dim_out, 1) f32

    kernel = functools.partial(_attention_kernel, heads=heads,
                               dim_key=dim_key, dim_value=dim_value)

    def const_spec(arr):
        nd = arr.ndim
        # Grid-invariant operand: same block every step, so Pallas fetches it once.
        return pl.BlockSpec(arr.shape, lambda b, t, _nd=nd: (0,) * _nd)

    out = pl.pallas_call(
        kernel,
        out_shape=jax.ShapeDtypeStruct((B, dim_out, N), jnp.float32),
        grid=(B, num_t),     # batch x query-tile; >= 2 parallel steps even at B == 1 (v7x 2 TCs)
        in_specs=[
            pl.BlockSpec((1, C, TN), lambda b, t: (b, 0, t)),      # x, query tile   (for q)
            pl.BlockSpec((1, C, N), lambda b, t: (b, 0, 0)),       # x, all keys     (for v)
            const_spec(w_qT), const_spec(b_qT),
            const_spec(w_vT), const_spec(b_vT),
            const_spec(w_mkT),
            pl.BlockSpec((heads, N, TN), lambda b, t: (0, 0, t)),  # pos bias, query tile
            const_spec(w_oT), const_spec(b_oT),
        ],
        out_specs=pl.BlockSpec((1, dim_out, TN), lambda b, t: (b, 0, t)),
        compiler_params=pltpu.CompilerParams(
            dimension_semantics=("parallel", "parallel"),
            vmem_limit_bytes=32 * 1024 * 1024),
    )(x, x, w_qT, b_qT, w_vT, b_vT, w_mkT, pos_T, w_oT, b_oT)

    return out.reshape(B, dim_out, F, F)                      # already NCHW; no transpose needed


def make_params(key, *, dim, fmap_size, heads, dim_key, dim_value, dim_out=None, eps=1e-5):
    dim_out = dim if dim_out is None else dim_out
    N = fmap_size * fmap_size
    inner_k, inner_v = heads * dim_key, heads * dim_value
    keys = iter(jax.random.split(key, 32))
    nxt = lambda: next(keys)

    def bn_affine(c):
        gamma = 1.0 + 0.1 * jax.random.normal(nxt(), (c,), jnp.float32)
        beta = 0.1 * jax.random.normal(nxt(), (c,), jnp.float32)
        mean = 0.1 * jax.random.normal(nxt(), (c,), jnp.float32)
        var = 0.5 + jnp.abs(jax.random.normal(nxt(), (c,), jnp.float32))
        scale = gamma / jnp.sqrt(var + eps)
        shift = beta - mean * scale
        return scale, shift

    # to_q: Conv2d(dim, inner_k, 1, bias=False) + BatchNorm2d  -> fold BN
    wq_conv = jax.random.normal(nxt(), (inner_k, dim), jnp.float32) / math.sqrt(dim)
    sq, bq = bn_affine(inner_k)
    w_q = (wq_conv * sq[:, None]).T                     # (dim, inner_k)
    b_q = bq[None, :]                                   # (1, inner_k)

    # to_v: Conv2d(dim, inner_v, 1, bias=False) + BatchNorm2d  -> fold BN
    wv_conv = jax.random.normal(nxt(), (inner_v, dim), jnp.float32) / math.sqrt(dim)
    sv, bv = bn_affine(inner_v)
    w_v = (wv_conv * sv[:, None]).T                     # (dim, inner_v)
    b_v = bv[None, :]

    # mk: Linear(dim_key, N, bias=False)
    w_mk_lin = jax.random.normal(nxt(), (N, dim_key), jnp.float32) / math.sqrt(dim_key)
    w_mk = w_mk_lin.T                                   # (dim_key, N)

    # mk_batch_norm: BatchNorm2d(N) over the 'j' channel axis (inference)
    mk_scale, mk_shift = bn_affine(N)
    mk_scale, mk_shift = mk_scale[None, :], mk_shift[None, :]   # (1, N)

    # pos bias: Embedding(N, heads) gathered with pos_indices, divided by scale
    emb = 0.02 * jax.random.normal(nxt(), (N, heads), jnp.float32)
    coords = jnp.stack(jnp.meshgrid(jnp.arange(fmap_size), jnp.arange(fmap_size),
                                    indexing="ij"), axis=-1).reshape(N, 2)
    rel = jnp.abs(coords[:, None, :] - coords[None, :, :])
    pos_indices = rel[..., 0] * fmap_size + rel[..., 1]          # (N, N)
    pos_bias = jnp.take(emb, pos_indices, axis=0)                # (N, N, heads)
    pos_bias = jnp.transpose(pos_bias, (2, 0, 1)) * math.sqrt(dim_key)   # bias / scale

    # to_out: ReLU -> Conv2d(inner_v, dim_out, 1) -> BatchNorm2d(dim_out)
    wo_conv = jax.random.normal(nxt(), (dim_out, inner_v), jnp.float32) / math.sqrt(inner_v)
    bo_conv = 0.1 * jax.random.normal(nxt(), (dim_out,), jnp.float32)
    # NOTE: the PyTorch __init__ zeros out_batch_norm.weight (gamma = 0), which makes
    # the forward output identically zero; we initialize a nonzero gamma so the kernel
    # output is non-trivial while keeping identical forward semantics.
    so, bo = bn_affine(dim_out)
    w_out = wo_conv.T                                   # (inner_v, dim_out)
    b_out = bo_conv[None, :]                            # (1, dim_out)
    out_bn_scale, out_bn_shift = so[None, :], bo[None, :]

    return dict(w_q=w_q, b_q=b_q, w_v=w_v, b_v=b_v, w_mk=w_mk,
                mk_scale=mk_scale, mk_shift=mk_shift, pos_bias=pos_bias,
                w_out=w_out, b_out=b_out,
                out_bn_scale=out_bn_scale, out_bn_shift=out_bn_shift)


def attention_diy_ref(x_nchw, params, *, heads, dim_key, dim_value):
    """Pure-JAX f32 reference with the original (un-folded) math, for correctness checking."""
    B, C, F, _ = x_nchw.shape
    N = F * F
    x = jnp.transpose(x_nchw, (0, 2, 3, 1)).reshape(B, N, C)
    q = x @ params["w_q"] + params["b_q"]
    v = x @ params["w_v"] + params["b_v"]
    q = q.reshape(B, N, heads, dim_key).transpose(0, 2, 1, 3)
    v = v.reshape(B, N, heads, dim_value).transpose(0, 2, 1, 3)
    dots = jnp.einsum("bhid,dj->bhij", q, params["w_mk"])
    dots = dots * params["mk_scale"] + params["mk_shift"]
    dots = dots + params["pos_bias"][None]
    attn = jax.nn.softmax(dots, axis=-1)
    out = jnp.einsum("bhij,bhjd->bhid", attn, v)
    out = out.transpose(0, 2, 1, 3).reshape(B, N, heads * dim_value)
    out = jnp.maximum(out, 0.0)
    y = out @ params["w_out"] + params["b_out"]
    y = y * params["out_bn_scale"] + params["out_bn_shift"]
    return y.reshape(B, F, F, -1).transpose(0, 3, 1, 2)


if __name__ == "__main__":
    B, DIM, FMAP = 2, 4, 16          # N = 256 -> two 128-wide query tiles per batch element
    HEADS, DK, DV = 2, 16, 16

    key = jax.random.PRNGKey(0)
    kx, kp = jax.random.split(key)
    x = jax.random.normal(kx, (B, DIM, FMAP, FMAP), dtype=jnp.float32)
    params = make_params(kp, dim=DIM, fmap_size=FMAP, heads=HEADS,
                         dim_key=DK, dim_value=DV)

    out = attention_diy_pallas(x, params, heads=HEADS, dim_key=DK, dim_value=DV)
    out = jax.block_until_ready(out)

    ref = attention_diy_ref(x, params, heads=HEADS, dim_key=DK, dim_value=DV)
    assert out.shape == (B, DIM, FMAP, FMAP), out.shape
    # bf16 matmul inputs (f32 accumulation) -> compare with a scaled max-error check:
    # absolute for small values, relative for large ones.
    err = jnp.max(jnp.abs(out - ref) / jnp.maximum(jnp.abs(ref), 1.0))
    max_err = float(err)
    assert max_err < 5e-2, f"max scaled err {max_err}"
    print("KERNEL_OK")
</pallas_src>

<mosaic_0001>
module attributes {stable_mosaic.version = 11 : i64} {
  func.func @_attention_kernel(%arg0: i32, %arg1: i32, %arg2: memref<1x4x128xbf16, #tpu.memory_space<vmem>>, %arg3: memref<1x4x256xbf16, #tpu.memory_space<vmem>>, %arg4: memref<32x4xbf16, #tpu.memory_space<vmem>>, %arg5: memref<32x1xf32, #tpu.memory_space<vmem>>, %arg6: memref<32x4xbf16, #tpu.memory_space<vmem>>, %arg7: memref<32x1xf32, #tpu.memory_space<vmem>>, %arg8: memref<256x16xf32, #tpu.memory_space<vmem>>, %arg9: memref<2x256x128xbf16, #tpu.memory_space<vmem>>, %arg10: memref<2x4x16xbf16, #tpu.memory_space<vmem>>, %arg11: memref<4x1xf32, #tpu.memory_space<vmem>>, %arg12: memref<1x4x128xf32, #tpu.memory_space<vmem>>) attributes {dimension_semantics = [#tpu.dimension_semantics<parallel>, #tpu.dimension_semantics<parallel>], iteration_bounds = array<i64: 2, 2>, scalar_prefetch = 0 : i64, scratch_operands = 0 : i64, tpu.core_type = #tpu.core_type<tc>, window_params = [{transform_indices = @transform_0, window_bounds = array<i64: 1, 4, 128>}, {transform_indices = @transform_1, window_bounds = array<i64: 1, 4, 256>}, {pipeline_mode = #tpu.pipeline_mode<synchronous>, transform_indices = @transform_2, window_bounds = array<i64: 32, 4>}, {pipeline_mode = #tpu.pipeline_mode<synchronous>, transform_indices = @transform_3, window_bounds = array<i64: 32, 1>}, {pipeline_mode = #tpu.pipeline_mode<synchronous>, transform_indices = @transform_4, window_bounds = array<i64: 32, 4>}, {pipeline_mode = #tpu.pipeline_mode<synchronous>, transform_indices = @transform_5, window_bounds = array<i64: 32, 1>}, {pipeline_mode = #tpu.pipeline_mode<synchronous>, transform_indices = @transform_6, window_bounds = array<i64: 256, 16>}, {transform_indices = @transform_7, window_bounds = array<i64: 2, 256, 128>}, {pipeline_mode = #tpu.pipeline_mode<synchronous>, transform_indices = @transform_8, window_bounds = array<i64: 2, 4, 16>}, {pipeline_mode = #tpu.pipeline_mode<synchronous>, transform_indices = @transform_9, window_bounds = array<i64: 4, 1>}, {transform_indices = @transform_10, window_bounds = array<i64: 1, 4, 128>}]} {
    %c0 = arith.constant 0 : index
    %c0_0 = arith.constant 0 : index
    %c0_1 = arith.constant 0 : index
    %0 = vector.load %arg2[%c0, %c0_0, %c0_1] : memref<1x4x128xbf16, #tpu.memory_space<vmem>>, vector<1x4x128xbf16>
    %1 = vector.shape_cast %0 : vector<1x4x128xbf16> to vector<4x128xbf16>
    %c0_2 = arith.constant 0 : index
    %c0_3 = arith.constant 0 : index
    %c0_4 = arith.constant 0 : index
    %2 = vector.load %arg3[%c0_2, %c0_3, %c0_4] : memref<1x4x256xbf16, #tpu.memory_space<vmem>>, vector<1x4x256xbf16>
    %3 = vector.shape_cast %2 : vector<1x4x256xbf16> to vector<4x256xbf16>
    %c0_5 = arith.constant 0 : index
    %c0_6 = arith.constant 0 : index
    %4 = vector.load %arg4[%c0_5, %c0_6] : memref<32x4xbf16, #tpu.memory_space<vmem>>, vector<32x4xbf16>
    %cst = arith.constant dense<0.000000e+00> : vector<32x128xf32>
    %5 = tpu.matmul %4, %1, %cst {dimension_numbers = #tpu.dot_dimension_numbers<[1], [0], [0], [1], [0, 0, 1, 1], [], []>} : vector<32x4xbf16>, vector<4x128xbf16>, vector<32x128xf32> -> vector<32x128xf32>
    %c0_7 = arith.constant 0 : index
    %c0_8 = arith.constant 0 : index
    %6 = vector.load %arg5[%c0_7, %c0_8] : memref<32x1xf32, #tpu.memory_space<vmem>>, vector<32x1xf32>
    %7 = vector.broadcast %6 : vector<32x1xf32> to vector<32x128xf32>
    %8 = arith.addf %5, %7 : vector<32x128xf32>
    %c0_9 = arith.constant 0 : index
    %c0_10 = arith.constant 0 : index
    %9 = vector.load %arg6[%c0_9, %c0_10] : memref<32x4xbf16, #tpu.memory_space<vmem>>, vector<32x4xbf16>
    %cst_11 = arith.constant dense<0.000000e+00> : vector<32x256xf32>
    %10 = tpu.matmul %9, %3, %cst_11 {dimension_numbers = #tpu.dot_dimension_numbers<[1], [0], [0], [1], [0, 0, 1, 1], [], []>} : vector<32x4xbf16>, vector<4x256xbf16>, vector<32x256xf32> -> vector<32x256xf32>
    %c0_12 = arith.constant 0 : index
    %c0_13 = arith.constant 0 : index
    %11 = vector.load %arg7[%c0_12, %c0_13] : memref<32x1xf32, #tpu.memory_space<vmem>>, vector<32x1xf32>
    %12 = vector.broadcast %11 : vector<32x1xf32> to vector<32x256xf32>
    %13 = arith.addf %10, %12 : vector<32x256xf32>
    %c0_14 = arith.constant 0 : index
    %c0_15 = arith.constant 0 : index
    %14 = vector.load %arg8[%c0_14, %c0_15] : memref<256x16xf32, #tpu.memory_space<vmem>>, vector<256x16xf32>
    %15 = vector.extract_strided_slice %8 {offsets = [0, 0], sizes = [16, 128], strides = [1, 1]} : vector<32x128xf32> to vector<16x128xf32>
    %cst_16 = arith.constant dense<0.000000e+00> : vector<256x128xf32>
    %16 = tpu.matmul %14, %15, %cst_16 {dimension_numbers = #tpu.dot_dimension_numbers<[1], [0], [0], [1], [0, 0, 1, 1], [], []>} : vector<256x16xf32>, vector<16x128xf32>, vector<256x128xf32> -> vector<256x128xf32>
    %c0_17 = arith.constant 0 : index
    %c0_18 = arith.constant 0 : index
    %c0_19 = arith.constant 0 : index
    %17 = vector.load %arg9[%c0_17, %c0_18, %c0_19] : memref<2x256x128xbf16, #tpu.memory_space<vmem>>, vector<1x256x128xbf16>
    %18 = vector.shape_cast %17 : vector<1x256x128xbf16> to vector<256x128xbf16>
    %19 = arith.extf %18 : vector<256x128xbf16> to vector<256x128xf32>
    %20 = arith.addf %16, %19 : vector<256x128xf32>
    %cst_20 = arith.constant dense<0xFF800000> : vector<128xf32>
    %21 = vector.multi_reduction <maximumf>, %20, %cst_20 [0] : vector<256x128xf32> to vector<128xf32>
    %22 = vector.shape_cast %21 : vector<128xf32> to vector<1x128xf32>
    %23 = vector.broadcast %22 : vector<1x128xf32> to vector<256x128xf32>
    %24 = arith.subf %20, %23 : vector<256x128xf32>
    %25 = math.exp %24 : vector<256x128xf32>
    %cst_21 = arith.constant dense<0.000000e+00> : vector<128xf32>
    %26 = vector.multi_reduction <add>, %25, %cst_21 [0] : vector<256x128xf32> to vector<128xf32>
    %27 = vector.shape_cast %26 : vector<128xf32> to vector<1x128xf32>
    %28 = tpu.reciprocal %27 {approx = true} : vector<1x128xf32> -> vector<1x128xf32>
    %29 = vector.broadcast %28 : vector<1x128xf32> to vector<256x128xf32>
    %30 = arith.mulf %25, %29 : vector<256x128xf32>
    %31 = vector.extract_strided_slice %13 {offsets = [0, 0], sizes = [16, 256], strides = [1, 1]} : vector<32x256xf32> to vector<16x256xf32>
    %32 = arith.truncf %31 : vector<16x256xf32> to vector<16x256xbf16>
    %33 = arith.truncf %30 : vector<256x128xf32> to vector<256x128xbf16>
    %cst_22 = arith.constant dense<0.000000e+00> : vector<16x128xf32>
    %34 = tpu.matmul %32, %33, %cst_22 {dimension_numbers = #tpu.dot_dimension_numbers<[1], [0], [0], [1], [0, 0, 1, 1], [], []>} : vector<16x256xbf16>, vector<256x128xbf16>, vector<16x128xf32> -> vector<16x128xf32>
    %cst_23 = arith.constant 0.000000e+00 : f32
    %35 = vector.broadcast %cst_23 : f32 to vector<16x128xf32>
    %36 = arith.maximumf %34, %35 : vector<16x128xf32>
    %c0_24 = arith.constant 0 : index
    %c0_25 = arith.constant 0 : index
    %c0_26 = arith.constant 0 : index
    %37 = vector.load %arg10[%c0_24, %c0_25, %c0_26] : memref<2x4x16xbf16, #tpu.memory_space<vmem>>, vector<1x4x16xbf16>
    %38 = vector.shape_cast %37 : vector<1x4x16xbf16> to vector<4x16xbf16>
    %39 = arith.truncf %36 : vector<16x128xf32> to vector<16x128xbf16>
    %cst_27 = arith.constant dense<0.000000e+00> : vector<4x128xf32>
    %40 = tpu.matmul %38, %39, %cst_27 {dimension_numbers = #tpu.dot_dimension_numbers<[1], [0], [0], [1], [0, 0, 1, 1], [], []>} : vector<4x16xbf16>, vector<16x128xbf16>, vector<4x128xf32> -> vector<4x128xf32>
    %41 = vector.extract_strided_slice %8 {offsets = [16, 0], sizes = [16, 128], strides = [1, 1]} : vector<32x128xf32> to vector<16x128xf32>
    %cst_28 = arith.constant dense<0.000000e+00> : vector<256x128xf32>
    %42 = tpu.matmul %14, %41, %cst_28 {dimension_numbers = #tpu.dot_dimension_numbers<[1], [0], [0], [1], [0, 0, 1, 1], [], []>} : vector<256x16xf32>, vector<16x128xf32>, vector<256x128xf32> -> vector<256x128xf32>
    %c1 = arith.constant 1 : index
    %c0_29 = arith.constant 0 : index
    %c0_30 = arith.constant 0 : index
    %43 = vector.load %arg9[%c1, %c0_29, %c0_30] : memref<2x256x128xbf16, #tpu.memory_space<vmem>>, vector<1x256x128xbf16>
    %44 = vector.shape_cast %43 : vector<1x256x128xbf16> to vector<256x128xbf16>
    %45 = arith.extf %44 : vector<256x128xbf16> to vector<256x128xf32>
    %46 = arith.addf %42, %45 : vector<256x128xf32>
    %cst_31 = arith.constant dense<0xFF800000> : vector<128xf32>
    %47 = vector.multi_reduction <maximumf>, %46, %cst_31 [0] : vector<256x128xf32> to vector<128xf32>
    %48 = vector.shape_cast %47 : vector<128xf32> to vector<1x128xf32>
    %49 = vector.broadcast %48 : vector<1x128xf32> to vector<256x128xf32>
    %50 = arith.subf %46, %49 : vector<256x128xf32>
    %51 = math.exp %50 : vector<256x128xf32>
    %cst_32 = arith.constant dense<0.000000e+00> : vector<128xf32>
    %52 = vector.multi_reduction <add>, %51, %cst_32 [0] : vector<256x128xf32> to vector<128xf32>
    %53 = vector.shape_cast %52 : vector<128xf32> to vector<1x128xf32>
    %54 = tpu.reciprocal %53 {approx = true} : vector<1x128xf32> -> vector<1x128xf32>
    %55 = vector.broadcast %54 : vector<1x128xf32> to vector<256x128xf32>
    %56 = arith.mulf %51, %55 : vector<256x128xf32>
    %57 = vector.extract_strided_slice %13 {offsets = [16, 0], sizes = [16, 256], strides = [1, 1]} : vector<32x256xf32> to vector<16x256xf32>
    %58 = arith.truncf %57 : vector<16x256xf32> to vector<16x256xbf16>
    %59 = arith.truncf %56 : vector<256x128xf32> to vector<256x128xbf16>
    %cst_33 = arith.constant dense<0.000000e+00> : vector<16x128xf32>
    %60 = tpu.matmul %58, %59, %cst_33 {dimension_numbers = #tpu.dot_dimension_numbers<[1], [0], [0], [1], [0, 0, 1, 1], [], []>} : vector<16x256xbf16>, vector<256x128xbf16>, vector<16x128xf32> -> vector<16x128xf32>
    %cst_34 = arith.constant 0.000000e+00 : f32
    %61 = vector.broadcast %cst_34 : f32 to vector<16x128xf32>
    %62 = arith.maximumf %60, %61 : vector<16x128xf32>
    %c1_35 = arith.constant 1 : index
    %c0_36 = arith.constant 0 : index
    %c0_37 = arith.constant 0 : index
    %63 = vector.load %arg10[%c1_35, %c0_36, %c0_37] : memref<2x4x16xbf16, #tpu.memory_space<vmem>>, vector<1x4x16xbf16>
    %64 = vector.shape_cast %63 : vector<1x4x16xbf16> to vector<4x16xbf16>
    %65 = arith.truncf %62 : vector<16x128xf32> to vector<16x128xbf16>
    %cst_38 = arith.constant dense<0.000000e+00> : vector<4x128xf32>
    %66 = tpu.matmul %64, %65, %cst_38 {dimension_numbers = #tpu.dot_dimension_numbers<[1], [0], [0], [1], [0, 0, 1, 1], [], []>} : vector<4x16xbf16>, vector<16x128xbf16>, vector<4x128xf32> -> vector<4x128xf32>
    %67 = arith.addf %40, %66 : vector<4x128xf32>
    %c0_39 = arith.constant 0 : index
    %c0_40 = arith.constant 0 : index
    %68 = vector.load %arg11[%c0_39, %c0_40] : memref<4x1xf32, #tpu.memory_space<vmem>>, vector<4x1xf32>
    %69 = vector.broadcast %68 : vector<4x1xf32> to vector<4x128xf32>
    %70 = arith.addf %67, %69 : vector<4x128xf32>
    %c0_41 = arith.constant 0 : index
    %c0_42 = arith.constant 0 : index
    %c0_43 = arith.constant 0 : index
    %71 = vector.load %arg12[%c0_41, %c0_42, %c0_43] : memref<1x4x128xf32, #tpu.memory_space<vmem>>, vector<1x4x128xf32>
    %72 = vector.shape_cast %71 : vector<1x4x128xf32> to vector<4x128xf32>
    %73 = vector.shape_cast %70 : vector<4x128xf32> to vector<1x4x128xf32>
    tpu.vector_store %arg12[%c0_41, %c0_42, %c0_43], %73 {strides = array<i32>} : memref<1x4x128xf32, #tpu.memory_space<vmem>>, vector<1x4x128xf32>,
    return
  }
  func.func @transform_0(%arg0: i32, %arg1: i32) -> (i32, i32, i32) {
    %c0_i32 = arith.constant 0 : i32
    %c0_i32_0 = arith.constant 0 : i32
    return %arg0, %c0_i32, %arg1 : i32, i32, i32
  }
  func.func @transform_1(%arg0: i32, %arg1: i32) -> (i32, i32, i32) {
    %c0_i32 = arith.constant 0 : i32
    %c0_i32_0 = arith.constant 0 : i32
    %c0_i32_1 = arith.constant 0 : i32
    return %arg0, %c0_i32, %c0_i32_0 : i32, i32, i32
  }
  func.func @transform_2(%arg0: i32, %arg1: i32) -> (i32, i32) {
    %c0_i32 = arith.constant 0 : i32
    %c0_i32_0 = arith.constant 0 : i32
    %c0_i32_1 = arith.constant 0 : i32
    return %c0_i32, %c0_i32_0 : i32, i32
  }
  func.func @transform_3(%arg0: i32, %arg1: i32) -> (i32, i32) {
    %c0_i32 = arith.constant 0 : i32
    %c0_i32_0 = arith.constant 0 : i32
    %c0_i32_1 = arith.constant 0 : i32
    return %c0_i32, %c0_i32_0 : i32, i32
  }
  func.func @transform_4(%arg0: i32, %arg1: i32) -> (i32, i32) {
    %c0_i32 = arith.constant 0 : i32
    %c0_i32_0 = arith.constant 0 : i32
    %c0_i32_1 = arith.constant 0 : i32
    return %c0_i32, %c0_i32_0 : i32, i32
  }
  func.func @transform_5(%arg0: i32, %arg1: i32) -> (i32, i32) {
    %c0_i32 = arith.constant 0 : i32
    %c0_i32_0 = arith.constant 0 : i32
    %c0_i32_1 = arith.constant 0 : i32
    return %c0_i32, %c0_i32_0 : i32, i32
  }
  func.func @transform_6(%arg0: i32, %arg1: i32) -> (i32, i32) {
    %c0_i32 = arith.constant 0 : i32
    %c0_i32_0 = arith.constant 0 : i32
    %c0_i32_1 = arith.constant 0 : i32
    return %c0_i32, %c0_i32_0 : i32, i32
  }
  func.func @transform_7(%arg0: i32, %arg1: i32) -> (i32, i32, i32) {
    %c0_i32 = arith.constant 0 : i32
    %c0_i32_0 = arith.constant 0 : i32
    %c0_i32_1 = arith.constant 0 : i32
    return %c0_i32, %c0_i32_0, %arg1 : i32, i32, i32
  }
  func.func @transform_8(%arg0: i32, %arg1: i32) -> (i32, i32, i32) {
    %c0_i32 = arith.constant 0 : i32
    %c0_i32_0 = arith.constant 0 : i32
    %c0_i32_1 = arith.constant 0 : i32
    %c0_i32_2 = arith.constant 0 : i32
    return %c0_i32, %c0_i32_0, %c0_i32_1 : i32, i32, i32
  }
  func.func @transform_9(%arg0: i32, %arg1: i32) -> (i32, i32) {
    %c0_i32 = arith.constant 0 : i32
    %c0_i32_0 = arith.constant 0 : i32
    %c0_i32_1 = arith.constant 0 : i32
    return %c0_i32, %c0_i32_0 : i32, i32
  }
  func.func @transform_10(%arg0: i32, %arg1: i32) -> (i32, i32, i32) {
    %c0_i32 = arith.constant 0 : i32
    %c0_i32_0 = arith.constant 0 : i32
    return %arg0, %c0_i32, %arg1 : i32, i32, i32
  }
}

</mosaic_0001>

<llo_original>
// kernel: tpu_custom_call.1
$region0: #{tpu_custom_call.1}
  #allocation0 [shape = 'u32[]', space=smem, size = 0x4, offset = 0x4, fixed_abs, tag = 'smem constant byte address 0x4 - core index']
  #allocation1 [shape = 'u32[144,128]{1,0:T(1,128)}', space=vmem, size = 0x12000, scoped, tag = 'internal scratch']
  %s0 = inlined_call_operand.vmem [shape: bf16[2,4,256], index: 0, kind: input, shape index: {}]
  %s1 = inlined_call_operand.vmem [shape: bf16[2,4,256], index: 1, kind: input, shape index: {}]
  %s2 = inlined_call_operand.vmem [shape: bf16[32,4], index: 2, kind: input, shape index: {}]
  %s3 = inlined_call_operand.vmem [shape: f32[32,1], index: 3, kind: input, shape index: {}]
  %s4 = inlined_call_operand.vmem [shape: bf16[32,4], index: 4, kind: input, shape index: {}]
  %s5 = inlined_call_operand.vmem [shape: f32[32,1], index: 5, kind: input, shape index: {}]
  %s6 = inlined_call_operand.vmem [shape: f32[256,16], index: 6, kind: input, shape index: {}]
  %s7 = inlined_call_operand.hbm [shape: bf16[2,256,256], index: 7, kind: input, shape index: {}]
  %s8 = inlined_call_operand.vmem [shape: bf16[2,4,16], index: 8, kind: input, shape index: {}]
  %s9 = inlined_call_operand.vmem [shape: f32[4,1], index: 9, kind: input, shape index: {}]
  %s10 = inlined_call_operand.hbm [shape: f32[2,4,256], index: 10, kind: output, shape index: {}]
  %s11 = sld [smem:[#allocation0]]
  $region77: #{tpu_custom_call.1} parent=0
    _
  %s13 = ssub.s32 1, %s11
  %s14 = scalar_select 0, %s13, %s11
  $region1: #{tpu_custom_call.1} parent=0
    #allocation2 [shape = 'u8[262144]{0}', space=vmem, size = 0x40000, scoped, tag = 'input window, operand 7']
    #allocation3 [shape = 's32[2]{0}', space=sflag, size = 0x8, scoped, tag = 'scoped memory for tpu_custom_call.1']
    #allocation4 [shape = 's32[2]{0}', space=sflag, size = 0x8, scoped, tag = 'scoped memory for tpu_custom_call.1']
    #allocation5 [shape = 'u8[4096]{0}', space=vmem, size = 0x1000, scoped, tag = 'output window, operand 0']
    %15 = vsyncpa [#allocation3], 0
    %s16 = scalar_lea.sflag [#allocation3], 1
    %17 = vsyncpa %s16, 0
    %18 = vsyncpa [#allocation4], 0
    %s19 = scalar_lea.sflag [#allocation4], 1
    %20 = vsyncpa %s19, 0
    loop: start=0, step=1, limit=6
    $region2: #{tpu_custom_call.1} parent=1 // loop_pre_header
      _
    $region3: #{tpu_custom_call.1} parent=1 // loop_header
      %s22 = sphi 0, %s26
      %p23 = scmp.ge.s32.totalorder %s22, 6
      %s29 = sphi 0, %s41
      %s30 = sphi 0, %s37
      %s31 = sphi 0, %s29
      %s32 = sphi 0, %s30
      %s33 = sphi 0, %s31
      %s34 = sphi 0, %s32
      %s46 = sphi 0, %s48
      %s49 = sphi 0, %s46
      %s50 = sphi 0, %s49
      %s66 = sphi 0, %s50
      %s72 = sphi 0, %s74
      %s75 = sphi 0, %s72
      %s76 = sphi 0, %s75
      %s92 = sphi 0, %s76
      %s96 = sphi 0, %s96
      %s98 = sphi 0, %s96
      %s99 = sphi 0, %s98
      %s113 = sphi 0, %s99
      %s117 = sphi 0, %s117
      %s119 = sphi 0, %s117
      %s120 = sphi 0, %s119
      %s134 = sphi 0, %s120
      %s138 = sphi 0, %s138
      %s140 = sphi 0, %s138
      %s141 = sphi 0, %s140
      %s155 = sphi 0, %s141
      %s159 = sphi 0, %s159
      %s161 = sphi 0, %s159
      %s162 = sphi 0, %s161
      %s176 = sphi 0, %s162
      %s180 = sphi 0, %s180
      %s182 = sphi 0, %s180
      %s183 = sphi 0, %s182
      %s197 = sphi 0, %s183
      %s203 = sphi 0, %s205
      %s206 = sphi 0, %s203
      %s207 = sphi 0, %s206
      %s223 = sphi 0, %s207
      %s227 = sphi 0, %s227
      %s229 = sphi 0, %s227
      %s230 = sphi 0, %s229
      %s244 = sphi 0, %s230
      %s248 = sphi 0, %s248
      %s250 = sphi 0, %s248
      %s251 = sphi 0, %s250
      %s265 = sphi 0, %s251
      %s273 = sphi 0, %s275
      %s276 = sphi 0, %s273
      %s277 = sphi 0, %s276
      %s293 = sphi 0, %s277
    $region4: #{tpu_custom_call.1} parent=1 // loop_header_branch
      %25 = sbr.rel (%p23) target = $region8
    $region5: #{tpu_custom_call.1} parent=1 // loop_body
      %s27 = ssub.s32 %s22, 1
      %s28 = ssub.s32 %s22, 2
      %s35 = sadd.s32 1, %s30
      %p36 = scmp.ge.s32.totalorder %s35, 2
      %s37 = scalar_select %p36, 0, %s35
      %s38 = sadd.s32 1, %s29
      %s39 = scalar_select %p36, %s38, %s29
      %p40 = scmp.ge.s32.totalorder %s39, 2
      %s41 = scalar_select %p40, 0, %s39
      %s42 = ssub.s32 %s29, %s41
      %s43 = ssub.s32 %s30, %s37
      %s44 = sor.u32 %s42, %s43
      %p45 = scmp.eq.s32.totalorder %s44, 0
      %s47 = sadd.s32 %s46, 1
      %s48 = scalar_select %p45, %s46, %s47
      %p51 = pneg %p45
      %p52 = scmp.eq.s32.totalorder %s22, 3
      %p53 = por %p51, %p52
      %p54 = scmp.ne.s32.totalorder %s46, %s49
      %p55 = scmp.eq.s32.totalorder %s22, 0
      %p56 = por %p54, %p55
      %p57 = scmp.ne.s32.totalorder %s46, %s49
      %p58 = scmp.eq.s32.totalorder %s27, 3
      %p59 = por %p57, %p58
      %p60 = scmp.ne.s32.totalorder %s49, %s50
      %p61 = scmp.eq.s32.totalorder %s27, 0
      %p62 = por %p60, %p61
      %p63 = scmp.ne.s32.totalorder %s49, %s50
      %p64 = scmp.eq.s32.totalorder %s28, 3
      %p65 = por %p63, %p64
      %p67 = scmp.ne.s32.totalorder %s50, %s66
      %p68 = scmp.eq.s32.totalorder %s28, 0
      %p69 = por %p67, %p68
      %s70 = ssub.s32 %s29, %s41
      %p71 = scmp.eq.s32.totalorder %s70, 0
      %s73 = sadd.s32 %s72, 1
      %s74 = scalar_select %p71, %s72, %s73
      %p77 = pneg %p71
      %p78 = scmp.eq.s32.totalorder %s22, 3
      %p79 = por %p77, %p78
      %p80 = scmp.ne.s32.totalorder %s72, %s75
      %p81 = scmp.eq.s32.totalorder %s22, 0
      %p82 = por %p80, %p81
      %p83 = scmp.ne.s32.totalorder %s72, %s75
      %p84 = scmp.eq.s32.totalorder %s27, 3
      %p85 = por %p83, %p84
      %p86 = scmp.ne.s32.totalorder %s75, %s76
      %p87 = scmp.eq.s32.totalorder %s27, 0
      %p88 = por %p86, %p87
      %p89 = scmp.ne.s32.totalorder %s75, %s76
      %p90 = scmp.eq.s32.totalorder %s28, 3
      %p91 = por %p89, %p90
      %p93 = scmp.ne.s32.totalorder %s76, %s92
      %p94 = scmp.eq.s32.totalorder %s28, 0
      %p95 = por %p93, %p94
      %s97 = sadd.s32 %s96, 1
      %p100 = scmp.eq.s32.totalorder %s22, 3
      %p101 = scmp.ne.s32.totalorder %s96, %s98
      %p102 = scmp.eq.s32.totalorder %s22, 0
      %p103 = por %p101, %p102
      %p104 = scmp.ne.s32.totalorder %s96, %s98
      %p105 = scmp.eq.s32.totalorder %s27, 3
      %p106 = por %p104, %p105
      %p107 = scmp.ne.s32.totalorder %s98, %s99
      %p108 = scmp.eq.s32.totalorder %s27, 0
      %p109 = por %p107, %p108
      %p110 = scmp.ne.s32.totalorder %s98, %s99
      %p111 = scmp.eq.s32.totalorder %s28, 3
      %p112 = por %p110, %p111
      %p114 = scmp.ne.s32.totalorder %s99, %s113
      %p115 = scmp.eq.s32.totalorder %s28, 0
      %p116 = por %p114, %p115
      %s118 = sadd.s32 %s117, 1
      %p121 = scmp.eq.s32.totalorder %s22, 3
      %p122 = scmp.ne.s32.totalorder %s117, %s119
      %p123 = scmp.eq.s32.totalorder %s22, 0
      %p124 = por %p122, %p123
      %p125 = scmp.ne.s32.totalorder %s117, %s119
      %p126 = scmp.eq.s32.totalorder %s27, 3
      %p127 = por %p125, %p126
      %p128 = scmp.ne.s32.totalorder %s119, %s120
      %p129 = scmp.eq.s32.totalorder %s27, 0
      %p130 = por %p128, %p129
      %p131 = scmp.ne.s32.totalorder %s119, %s120
      %p132 = scmp.eq.s32.totalorder %s28, 3
      %p133 = por %p131, %p132
      %p135 = scmp.ne.s32.totalorder %s120, %s134
      %p136 = scmp.eq.s32.totalorder %s28, 0
      %p137 = por %p135, %p136
      %s139 = sadd.s32 %s138, 1
      %p142 = scmp.eq.s32.totalorder %s22, 3
      %p143 = scmp.ne.s32.totalorder %s138, %s140
      %p144 = scmp.eq.s32.totalorder %s22, 0
      %p145 = por %p143, %p144
      %p146 = scmp.ne.s32.totalorder %s138, %s140
      %p147 = scmp.eq.s32.totalorder %s27, 3
      %p148 = por %p146, %p147
      %p149 = scmp.ne.s32.totalorder %s140, %s141
      %p150 = scmp.eq.s32.totalorder %s27, 0
      %p151 = por %p149, %p150
      %p152 = scmp.ne.s32.totalorder %s140, %s141
      %p153 = scmp.eq.s32.totalorder %s28, 3
      %p154 = por %p152, %p153
      %p156 = scmp.ne.s32.totalorder %s141, %s155
      %p157 = scmp.eq.s32.totalorder %s28, 0
      %p158 = por %p156, %p157
      %s160 = sadd.s32 %s159, 1
      %p163 = scmp.eq.s32.totalorder %s22, 3
      %p164 = scmp.ne.s32.totalorder %s159, %s161
      %p165 = scmp.eq.s32.totalorder %s22, 0
      %p166 = por %p164, %p165
      %p167 = scmp.ne.s32.totalorder %s159, %s161
      %p168 = scmp.eq.s32.totalorder %s27, 3
      %p169 = por %p167, %p168
      %p170 = scmp.ne.s32.totalorder %s161, %s162
      %p171 = scmp.eq.s32.totalorder %s27, 0
      %p172 = por %p170, %p171
      %p173 = scmp.ne.s32.totalorder %s161, %s162
      %p174 = scmp.eq.s32.totalorder %s28, 3
      %p175 = por %p173, %p174
      %p177 = scmp.ne.s32.totalorder %s162, %s176
      %p178 = scmp.eq.s32.totalorder %s28, 0
      %p179 = por %p177, %p178
      %s181 = sadd.s32 %s180, 1
      %p184 = scmp.eq.s32.totalorder %s22, 3
      %p185 = scmp.ne.s32.totalorder %s180, %s182
      %p186 = scmp.eq.s32.totalorder %s22, 0
      %p187 = por %p185, %p186
      %p188 = scmp.ne.s32.totalorder %s180, %s182
      %p189 = scmp.eq.s32.totalorder %s27, 3
      %p190 = por %p188, %p189
      %p191 = scmp.ne.s32.totalorder %s182, %s183
      %p192 = scmp.eq.s32.totalorder %s27, 0
      %p193 = por %p191, %p192
      %p194 = scmp.ne.s32.totalorder %s182, %s183
      %p195 = scmp.eq.s32.totalorder %s28, 3
      %p196 = por %p194, %p195
      %p198 = scmp.ne.s32.totalorder %s183, %s197
      %p199 = scmp.eq.s32.totalorder %s28, 0
      %p200 = por %p198, %p199
      %s201 = ssub.s32 %s30, %s37
      %p202 = scmp.eq.s32.totalorder %s201, 0
      %s204 = sadd.s32 %s203, 1
      %s205 = scalar_select %p202, %s203, %s204
      %p208 = pneg %p202
      %p209 = scmp.eq.s32.totalorder %s22, 3
      %p210 = por %p208, %p209
      %p211 = scmp.ne.s32.totalorder %s203, %s206
      %p212 = scmp.eq.s32.totalorder %s22, 0
      %p213 = por %p211, %p212
      %p214 = scmp.ne.s32.totalorder %s203, %s206
      %p215 = scmp.eq.s32.totalorder %s27, 3
      %p216 = por %p214, %p215
      %p217 = scmp.ne.s32.totalorder %s206, %s207
      %p218 = scmp.eq.s32.totalorder %s27, 0
      %p219 = por %p217, %p218
      %p220 = scmp.ne.s32.totalorder %s206, %s207
      %p221 = scmp.eq.s32.totalorder %s28, 3
      %p222 = por %p220, %p221
      %p224 = scmp.ne.s32.totalorder %s207, %s223
      %p225 = scmp.eq.s32.totalorder %s28, 0
      %p226 = por %p224, %p225
      %s228 = sadd.s32 %s227, 1
      %p231 = scmp.eq.s32.totalorder %s22, 3
      %p232 = scmp.ne.s32.totalorder %s227, %s229
      %p233 = scmp.eq.s32.totalorder %s22, 0
      %p234 = por %p232, %p233
      %p235 = scmp.ne.s32.totalorder %s227, %s229
      %p236 = scmp.eq.s32.totalorder %s27, 3
      %p237 = por %p235, %p236
      %p238 = scmp.ne.s32.totalorder %s229, %s230
      %p239 = scmp.eq.s32.totalorder %s27, 0
      %p240 = por %p238, %p239
      %p241 = scmp.ne.s32.totalorder %s229, %s230
      %p242 = scmp.eq.s32.totalorder %s28, 3
      %p243 = por %p241, %p242
      %p245 = scmp.ne.s32.totalorder %s230, %s244
      %p246 = scmp.eq.s32.totalorder %s28, 0
      %p247 = por %p245, %p246
      %s249 = sadd.s32 %s248, 1
      %p252 = scmp.eq.s32.totalorder %s22, 3
      %p253 = scmp.ne.s32.totalorder %s248, %s250
      %p254 = scmp.eq.s32.totalorder %s22, 0
      %p255 = por %p253, %p254
      %p256 = scmp.ne.s32.totalorder %s248, %s250
      %p257 = scmp.eq.s32.totalorder %s27, 3
      %p258 = por %p256, %p257
      %p259 = scmp.ne.s32.totalorder %s250, %s251
      %p260 = scmp.eq.s32.totalorder %s27, 0
      %p261 = por %p259, %p260
      %p262 = scmp.ne.s32.totalorder %s250, %s251
      %p263 = scmp.eq.s32.totalorder %s28, 3
      %p264 = por %p262, %p263
      %p266 = scmp.ne.s32.totalorder %s251, %s265
      %p267 = scmp.eq.s32.totalorder %s28, 0
      %p268 = por %p266, %p267
      %s269 = ssub.s32 %s29, %s41
      %s270 = ssub.s32 %s30, %s37
      %s271 = sor.u32 %s269, %s270
      %p272 = scmp.eq.s32.totalorder %s271, 0
      %s274 = sadd.s32 %s273, 1
      %s275 = scalar_select %p272, %s273, %s274
      %p278 = pneg %p272
      %p279 = scmp.eq.s32.totalorder %s22, 3
      %p280 = por %p278, %p279
      %p281 = scmp.ne.s32.totalorder %s273, %s276
      %p282 = scmp.eq.s32.totalorder %s22, 0
      %p283 = por %p281, %p282
      %p284 = scmp.ne.s32.totalorder %s273, %s276
      %p285 = scmp.eq.s32.totalorder %s27, 3
      %p286 = por %p284, %p285
      %p287 = scmp.ne.s32.totalorder %s276, %s277
      %p288 = scmp.eq.s32.totalorder %s27, 0
      %p289 = por %p287, %p288
      %p290 = scmp.ne.s32.totalorder %s276, %s277
      %p291 = scmp.eq.s32.totalorder %s28, 3
      %p292 = por %p290, %p291
      %p294 = scmp.ne.s32.totalorder %s277, %s293
      %p295 = scmp.eq.s32.totalorder %s28, 0
      %p296 = por %p294, %p295
      %p297 = scmp.le.s32.totalorder 1, %s22
      %p298 = scmp.lt.s32.totalorder %s22, 5
      %p299 = pnand %p297, %p298
      %p300 = pneg %p299
      // Predicated region
      $region9: #{tpu_custom_call.1} parent=5 // pred_check
        _
      $region10: #{tpu_custom_call.1} parent=5 // pred_check_branch
        %302 = sbr.rel (%p299) target = $region12
      $region11: #{tpu_custom_call.1} parent=5 // pred_region
        %s303 = ssub.s32 %s22, 1
        // Predicated region
        $region13: #{tpu_custom_call.1} parent=11 // pred_check
          %p304 = pneg %p109
        $region14: #{tpu_custom_call.1} parent=11 // pred_check_branch
          %306 = sbr.rel (%p304) target = $region16
        $region15: #{tpu_custom_call.1} parent=11 // pred_region
          _
        $region16: #{tpu_custom_call.1} parent=11 // pred_fallthru
          _
        // Predicated region
        $region17: #{tpu_custom_call.1} parent=11 // pred_check
          %p307 = pneg %p130
        $region18: #{tpu_custom_call.1} parent=11 // pred_check_branch
          %309 = sbr.rel (%p307) target = $region20
        $region19: #{tpu_custom_call.1} parent=11 // pred_region
          _
        $region20: #{tpu_custom_call.1} parent=11 // pred_fallthru
          _
        // Predicated region
        $region21: #{tpu_custom_call.1} parent=11 // pred_check
          %p310 = pneg %p151
        $region22: #{tpu_custom_call.1} parent=11 // pred_check_branch
          %312 = sbr.rel (%p310) target = $region24
        $region23: #{tpu_custom_call.1} parent=11 // pred_region
          _
        $region24: #{tpu_custom_call.1} parent=11 // pred_fallthru
          _
        // Predicated region
        $region25: #{tpu_custom_call.1} parent=11 // pred_check
          %p313 = pneg %p172
        $region26: #{tpu_custom_call.1} parent=11 // pred_check_branch
          %315 = sbr.rel (%p313) target = $region28
        $region27: #{tpu_custom_call.1} parent=11 // pred_region
          _
        $region28: #{tpu_custom_call.1} parent=11 // pred_fallthru
          _
        // Predicated region
        $region29: #{tpu_custom_call.1} parent=11 // pred_check
          %p316 = pneg %p193
        $region30: #{tpu_custom_call.1} parent=11 // pred_check_branch
          %318 = sbr.rel (%p316) target = $region32
        $region31: #{tpu_custom_call.1} parent=11 // pred_region
          _
        $region32: #{tpu_custom_call.1} parent=11 // pred_fallthru
          _
        // Predicated region
        $region33: #{tpu_custom_call.1} parent=11 // pred_check
          %p319 = pneg %p240
        $region34: #{tpu_custom_call.1} parent=11 // pred_check_branch
          %321 = sbr.rel (%p319) target = $region36
        $region35: #{tpu_custom_call.1} parent=11 // pred_region
          _
        $region36: #{tpu_custom_call.1} parent=11 // pred_fallthru
          _
        // Predicated region
        $region37: #{tpu_custom_call.1} parent=11 // pred_check
          %p322 = pneg %p261
        $region38: #{tpu_custom_call.1} parent=11 // pred_check_branch
          %324 = sbr.rel (%p322) target = $region40
        $region39: #{tpu_custom_call.1} parent=11 // pred_region
          _
        $region40: #{tpu_custom_call.1} parent=11 // pred_fallthru
          _
      $region12: #{tpu_custom_call.1} parent=5 // pred_fallthru
        _
      %p325 = scmp.lt.s32.totalorder %s22, 4
      // Predicated region
      $region41: #{tpu_custom_call.1} parent=5 // pred_check
        %p326 = pneg %p325
      $region42: #{tpu_custom_call.1} parent=5 // pred_check_branch
        %328 = sbr.rel (%p326) target = $region44
      $region43: #{tpu_custom_call.1} parent=5 // pred_region
        // Predicated region
        $region45: #{tpu_custom_call.1} parent=43 // pred_check
          %p329 = pneg %p56
        $region46: #{tpu_custom_call.1} parent=43 // pred_check_branch
          %331 = sbr.rel (%p329) target = $region48
        $region47: #{tpu_custom_call.1} parent=43 // pred_region
          %p332 = scmp.lt.s32.totalorder %s29, 1
          %s333 = scalar_select %p332, %s29, 1
          %p334 = scmp.lt.s32.totalorder %s30, 1
          %s335 = scalar_select %p334, %s30, 1
          %s336 = smul.addr %s333, 2
          %s337 = sadd.s32 %s335, %s336
          %s338 = smul.addr %s337, 2
          %s339 = scalar_lea.vmem %s0, %s338
        $region48: #{tpu_custom_call.1} parent=43 // pred_fallthru
          _
        // Predicated region
        $region49: #{tpu_custom_call.1} parent=43 // pred_check
          %p340 = pneg %p82
        $region50: #{tpu_custom_call.1} parent=43 // pred_check_branch
          %342 = sbr.rel (%p340) target = $region52
        $region51: #{tpu_custom_call.1} parent=43 // pred_region
          %p343 = scmp.lt.s32.totalorder %s29, 1
          %s344 = scalar_select %p343, %s29, 1
          %s345 = smul.addr %s344, 2
          %s346 = smul.addr %s345, 2
          %s347 = scalar_lea.vmem %s1, %s346
        $region52: #{tpu_custom_call.1} parent=43 // pred_fallthru
          _
        // Predicated region
        $region53: #{tpu_custom_call.1} parent=43 // pred_check
          %p348 = pneg %p213
        $region54: #{tpu_custom_call.1} parent=43 // pred_check_branch
          %350 = sbr.rel (%p348) target = $region56
        $region55: #{tpu_custom_call.1} parent=43 // pred_region
          %s351 = sand.u32 %s203, 1
          %s352 = scalar_lea.sflag [#allocation3], %s351
          %s353 = sand.u32 %s203, 1
          %s354 = smul.addr %s353, 256
          %s355 = scalar_lea.vmem [#allocation2], %s354
          %s357 = ssub.s32 4096, 4096
          %358 = vsyncadd %s352, %s357
          %s359 = smul.addr %s30, 64
          %s360 = scalar_lea.hbm %s7, %s359
          %s361 = sshll.u32 %s355, 4
          %s362 = int_to_ptr.vmem [resolvable:$true] %s361
          %367 = dma.hbm_to_vmem [thread:$0]  %s360, 4096, %s362, %s352, 128, 64, 4
        $region56: #{tpu_custom_call.1} parent=43 // pred_fallthru
          _
      $region44: #{tpu_custom_call.1} parent=5 // pred_fallthru
        _
      %p368 = scmp.le.s32.totalorder 1, %s22
      %p369 = scmp.lt.s32.totalorder %s22, 5
      %p370 = pnand %p368, %p369
      %p371 = pneg %p370
      // Predicated region
      $region57: #{tpu_custom_call.1} parent=5 // pred_check
        _
      $region58: #{tpu_custom_call.1} parent=5 // pred_check_branch
        %373 = sbr.rel (%p370) target = $region60
      $region59: #{tpu_custom_call.1} parent=5 // pred_region
        %s374 = ssub.s32 %s22, 1
        %s375 = sand.u32 %s206, 1
        %s376 = scalar_lea.sflag [#allocation3], %s375
        %s377 = sand.u32 %s206, 1
        %s378 = smul.addr %s377, 256
        %s379 = scalar_lea.vmem [#allocation2], %s378
        // Predicated region
        $region61: #{tpu_custom_call.1} parent=59 // pred_check
          %p380 = pneg %p219
        $region62: #{tpu_custom_call.1} parent=59 // pred_check_branch
          %382 = sbr.rel (%p380) target = $region64
        $region63: #{tpu_custom_call.1} parent=59 // pred_region
          %383 = dma.done %s376, 4096
        $region64: #{tpu_custom_call.1} parent=59 // pred_fallthru
          _
        %p384 = scmp.lt.s32.totalorder %s31, 1
        %s385 = scalar_select %p384, %s31, 1
        %p386 = scmp.lt.s32.totalorder %s32, 1
        %s387 = scalar_select %p386, %s32, 1
        %s388 = smul.addr %s385, 2
        %s389 = sadd.s32 %s387, %s388
        %s390 = smul.addr %s389, 2
        %s391 = scalar_lea.vmem %s0, %s390
        %p392 = pneg %p62
        %p393 = pneg %p59
        %p394 = scmp.lt.s32.totalorder %s31, 1
        %s395 = scalar_select %p394, %s31, 1
        %s396 = smul.addr %s395, 2
        %s397 = smul.addr %s396, 2
        %s398 = scalar_lea.vmem %s1, %s397
        %p399 = pneg %p88
        %p400 = pneg %p85
        %p401 = pneg %p109
        %p402 = pneg %p106
        %p403 = pneg %p130
        %p404 = pneg %p127
        %p405 = pneg %p151
        %p406 = pneg %p148
        %p407 = pneg %p172
        %p408 = pneg %p169
        %p409 = pneg %p193
        %p410 = pneg %p190
        %s411 = sand.u32 %s206, 1
        %s412 = scalar_lea.sflag [#allocation3], %s411
        %s413 = sand.u32 %s206, 1
        %s414 = smul.addr %s413, 256
        %s415 = scalar_lea.vmem [#allocation2], %s414
        %p416 = pneg %p219
        %p417 = pneg %p216
        %p418 = pneg %p240
        %p419 = pneg %p237
        %p420 = pneg %p261
        %p421 = pneg %p258
        %p422 = pneg %p289
        %p423 = pneg %p286
        %s424 = sand.u32 %s276, 1
        %s425 = scalar_lea.sflag [#allocation4], %s424
        %s426 = sand.u32 %s276, 1
        %s427 = smul.addr %s426, 4
        %s428 = scalar_lea.vmem [#allocation5], %s427
        %p429 = scmp.lt.s32.totalorder %s31, 1
        %s430 = scalar_select %p429, %s31, 1
        %p431 = scmp.lt.s32.totalorder %s32, 1
        %s432 = scalar_select %p431, %s32, 1
        %s433 = smul.addr %s430, 2
        %s434 = sadd.s32 %s432, %s433
        %s435 = smul.addr %s434, 2
        %s436 = scalar_lea.vmem %s0, %s435
        %p437 = scmp.lt.s32.totalorder %s31, 1
        %s438 = scalar_select %p437, %s31, 1
        %s439 = smul.addr %s438, 2
        %s440 = smul.addr %s439, 2
        %s441 = scalar_lea.vmem %s1, %s440
        %v443 = vld [vmem:[%s436] sm:$0x3]
        %v444 = vld [vmem:[%s441] sm:$0xf]
        %v445 = vld [vmem:[%s2] sm:$0xf]
        %v446 = vld [vmem:[%s2 + $0x4] sm:$0xf]
        %v447 = vld [vmem:[%s2 + $0x8] sm:$0xf]
        %v448 = vld [vmem:[%s2 + $0xc] sm:$0xf]
        %v449 = vld [vmem:[%s3] sm:$0xff]
        %v450 = vld [vmem:[%s3 + $0x8] sm:$0xff]
        %v451 = vld [vmem:[%s3 + $0x10] sm:$0xff]
        %v452 = vld [vmem:[%s3 + $0x18] sm:$0xff]
        %454 = vset.pattern.permute.xlu0 0
        %455 = vperm.xlu0 %454, %v449
        %v456 = vpop.permute.xlu0 %455
        %459 = vset.pattern.permute.xlu0 0
        %460 = vperm.xlu0 %459, %v450
        %v461 = vpop.permute.xlu0 %460
        %464 = vset.pattern.permute.xlu0 0
        %465 = vperm.xlu0 %464, %v451
        %v466 = vpop.permute.xlu0 %465
        %469 = vset.pattern.permute.xlu0 0
        %470 = vperm.xlu0 %469, %v452
        %v471 = vpop.permute.xlu0 %470
        %v477 = vunpack.c.l.b16 %v445
        %v478 = vunpack.c.l.b16 %v446
        %v479 = vunpack.c.l.b16 %v447
        %v480 = vunpack.c.l.b16 %v448
        %v481 = vpack.c.b16 %v478, %v477
        %v482 = vpack.c.b16 %v480, %v479
        %vm483 = vcmask 31744
        %v485 = vsel %vm483, %v481, 0
        %v488 = vsel %vm483, %v482, 0
        %vm490 = vcmask 1041408
        %v492 = vsel %vm490, %v443, 0
        %494 = vmatprep.subr.bf16.mxu0 0
        %495 = vmatpush1.bf16.msra.mxu0 %v492
        %496 = vmatprep.subr.bf16.mxu0 0
        %497 = vmatpush1.bf16.msra.mxu0 0
        %498 = vmatprep.subr.bf16.mxu0 0
        %499 = vmatpush1.bf16.msra.mxu0 0
        %500 = vmatprep.subr.bf16.mxu0 0
        %501 = vmatpush1.bf16.msra.mxu0 0
        %502 = vmatprep.subr.bf16.mxu0 0
        %503 = vmatpush1.bf16.msra.mxu0 0
        %504 = vmatprep.subr.bf16.mxu0 0
        %505 = vmatpush1.bf16.msra.mxu0 0
        %506 = vmatprep.subr.bf16.mxu0 0
        %507 = vmatpush1.bf16.msra.mxu0 0
        %508 = vmatprep.subr.bf16.mxu0 0
        %509 = vmatpush1.bf16.msra.mxu0 0
        %510 = vmatprep.subr.bf16.mxu0 0
        %511 = vmatpush1.bf16.msra.mxu0 0
        %512 = vmatprep.subr.bf16.mxu0 0
        %513 = vmatpush1.bf16.msra.mxu0 0
        %514 = vmatprep.subr.bf16.mxu0 0
        %515 = vmatpush1.bf16.msra.mxu0 0
        %516 = vmatprep.subr.bf16.mxu0 0
        %517 = vmatpush1.bf16.msra.mxu0 0
        %518 = vmatprep.subr.bf16.mxu0 0
        %519 = vmatpush1.bf16.msra.mxu0 0
        %520 = vmatprep.subr.bf16.mxu0 0
        %521 = vmatpush1.bf16.msra.mxu0 0
        %522 = vmatprep.subr.bf16.mxu0 0
        %523 = vmatpush1.bf16.msra.mxu0 0
        %524 = vmatprep.subr.bf16.mxu0 0
        %525 = vmatpush1.bf16.msra.mxu0 0
        %526 = vmatprep.mubr.bf16.mxu0 0
        %527 = vmatmul.mubr.bf16.gmra.mrb[0].mxu0 %v485
        %v528 = vpop.f32.mrb[0].mxu0
        %v529 = vadd.f32 %v456, %v528
        %v530 = vpop.f32.mrb[0].mxu0
        %v531 = vpop.f32.mrb[0].mxu0
        %v532 = vadd.f32 %v461, %v531
        %v533 = vpop.f32.mrb[0].mxu0
        %534 = vmatprep.mubr.bf16.mxu0 0
        %535 = vmatmul.mubr.bf16.gmra.mrb[0].mxu0 %v488
        %v536 = vpop.f32.mrb[0].mxu0
        %v537 = vadd.f32 %v466, %v536
        %v538 = vpop.f32.mrb[0].mxu0
        %v539 = vpop.f32.mrb[0].mxu0
        %v540 = vadd.f32 %v471, %v539
        %v541 = vpop.f32.mrb[0].mxu0
        %542 = vdwg.mxu0
        %v543 = vld [vmem:[%s4] sm:$0xf]
        %v544 = vld [vmem:[%s4 + $0x4] sm:$0xf]
        %v545 = vld [vmem:[%s4 + $0x8] sm:$0xf]
        %v546 = vld [vmem:[%s4 + $0xc] sm:$0xf]
        %v547 = vld [vmem:[%s5] sm:$0xff]
        %v548 = vld [vmem:[%s5 + $0x8] sm:$0xff]
        %v549 = vld [vmem:[%s5 + $0x10] sm:$0xff]
        %v550 = vld [vmem:[%s5 + $0x18] sm:$0xff]
        %552 = vset.pattern.permute.xlu0 0
        %553 = vperm.xlu0 %552, %v547
        %v554 = vpop.permute.xlu0 %553
        %557 = vset.pattern.permute.xlu0 0
        %558 = vperm.xlu0 %557, %v548
        %v559 = vpop.permute.xlu0 %558
        %562 = vset.pattern.permute.xlu0 0
        %563 = vperm.xlu0 %562, %v549
        %v564 = vpop.permute.xlu0 %563
        %567 = vset.pattern.permute.xlu0 0
        %568 = vperm.xlu0 %567, %v550
        %v569 = vpop.permute.xlu0 %568
        %v575 = vunpack.c.l.b16 %v543
        %v576 = vunpack.c.l.b16 %v544
        %v577 = vunpack.c.l.b16 %v545
        %v578 = vunpack.c.l.b16 %v546
        %v579 = vpack.c.b16 %v576, %v575
        %v580 = vpack.c.b16 %v578, %v577
        %v583 = vunpack.c.l.s4 1983009808
        %v584 = vunpack.c.0.s8 %v583
        %v585 = vlaneseq
        %v586 = vshrl.u32 %v585, 7
        %v587 = vsub.s32 %v584, %v586
        %v588 = vrot.slane %v444, %v587
        %v589 = vcombine.high %v588, %v588
        %v591 = vsel %vm483, %v579, 0
        %v594 = vsel %vm483, %v580, 0
        %v597 = vsel %vm490, %v588, 0
        %v600 = vsel %vm490, %v589, 0
        %602 = vmatprep.subr.bf16.mxu0 %v600
        %603 = vmatpush1.bf16.msra.mxu0 %v597
        %604 = vmatprep.subr.bf16.mxu0 0
        %605 = vmatpush1.bf16.msra.mxu0 0
        %606 = vmatprep.subr.bf16.mxu0 0
        %607 = vmatpush1.bf16.msra.mxu0 0
        %608 = vmatprep.subr.bf16.mxu0 0
        %609 = vmatpush1.bf16.msra.mxu0 0
        %610 = vmatprep.subr.bf16.mxu0 0
        %611 = vmatpush1.bf16.msra.mxu0 0
        %612 = vmatprep.subr.bf16.mxu0 0
        %613 = vmatpush1.bf16.msra.mxu0 0
        %614 = vmatprep.subr.bf16.mxu0 0
        %615 = vmatpush1.bf16.msra.mxu0 0
        %616 = vmatprep.subr.bf16.mxu0 0
        %617 = vmatpush1.bf16.msra.mxu0 0
        %618 = vmatprep.subr.bf16.mxu0 0
        %619 = vmatpush1.bf16.msra.mxu0 0
        %620 = vmatprep.subr.bf16.mxu0 0
        %621 = vmatpush1.bf16.msra.mxu0 0
        %622 = vmatprep.subr.bf16.mxu0 0
        %623 = vmatpush1.bf16.msra.mxu0 0
        %624 = vmatprep.subr.bf16.mxu0 0
        %625 = vmatpush1.bf16.msra.mxu0 0
        %626 = vmatprep.subr.bf16.mxu0 0
        %627 = vmatpush1.bf16.msra.mxu0 0
        %628 = vmatprep.subr.bf16.mxu0 0
        %629 = vmatpush1.bf16.msra.mxu0 0
        %630 = vmatprep.subr.bf16.mxu0 0
        %631 = vmatpush1.bf16.msra.mxu0 0
        %632 = vmatprep.subr.bf16.mxu0 0
        %633 = vmatpush1.bf16.msra.mxu0 0
        %634 = vmatprep.mubr.bf16.mxu0 0
        %635 = vmatmul.mubr.bf16.gmra.mrb[0].mxu0 %v591
        %v636 = vpop.f32.mrb[0].mxu0
        %v637 = vadd.f32 %v554, %v636
        %v638 = vpop.f32.mrb[0].mxu0
        %v639 = vadd.f32 %v554, %v638
        %v640 = vpop.f32.mrb[0].mxu0
        %v641 = vadd.f32 %v559, %v640
        %v642 = vpop.f32.mrb[0].mxu0
        %v643 = vadd.f32 %v559, %v642
        %644 = vmatprep.mubr.bf16.mxu0 0
        %645 = vmatmul.mubr.bf16.gmra.mrb[0].mxu0 %v594
        %v646 = vpop.f32.mrb[0].mxu0
        %v647 = vadd.f32 %v564, %v646
        %v648 = vpop.f32.mrb[0].mxu0
        %v649 = vadd.f32 %v564, %v648
        %v650 = vpop.f32.mrb[0].mxu0
        %v651 = vadd.f32 %v569, %v650
        %v652 = vpop.f32.mrb[0].mxu0
        %v653 = vadd.f32 %v569, %v652
        %654 = vdwg.mxu0
        %v655 = vld [vmem:[%s6] sm:$0xff]
        %v656 = vld [vmem:[%s6 + $0x8] sm:$0xff]
        %v657 = vld [vmem:[%s6 + $0x10] sm:$0xff]
        %v658 = vld [vmem:[%s6 + $0x18] sm:$0xff]
        %v659 = vld [vmem:[%s6 + $0x20] sm:$0xff]
        %v660 = vld [vmem:[%s6 + $0x28] sm:$0xff]
        %v661 = vld [vmem:[%s6 + $0x30] sm:$0xff]
        %v662 = vld [vmem:[%s6 + $0x38] sm:$0xff]
        %v663 = vld [vmem:[%s6 + $0x40] sm:$0xff]
        %v664 = vld [vmem:[%s6 + $0x48] sm:$0xff]
        %v665 = vld [vmem:[%s6 + $0x50] sm:$0xff]
        %v666 = vld [vmem:[%s6 + $0x58] sm:$0xff]
        %v667 = vld [vmem:[%s6 + $0x60] sm:$0xff]
        %v668 = vld [vmem:[%s6 + $0x68] sm:$0xff]
        %v669 = vld [vmem:[%s6 + $0x70] sm:$0xff]
        %v670 = vld [vmem:[%s6 + $0x78] sm:$0xff]
        %v671 = vld [vmem:[%s6 + $0x80] sm:$0xff]
        %v672 = vld [vmem:[%s6 + $0x88] sm:$0xff]
        %v673 = vld [vmem:[%s6 + $0x90] sm:$0xff]
        %v674 = vld [vmem:[%s6 + $0x98] sm:$0xff]
        %v675 = vld [vmem:[%s6 + $0xa0] sm:$0xff]
        %v676 = vld [vmem:[%s6 + $0xa8] sm:$0xff]
        %v677 = vld [vmem:[%s6 + $0xb0] sm:$0xff]
        %v678 = vld [vmem:[%s6 + $0xb8] sm:$0xff]
        %v679 = vld [vmem:[%s6 + $0xc0] sm:$0xff]
        %v680 = vld [vmem:[%s6 + $0xc8] sm:$0xff]
        %v681 = vld [vmem:[%s6 + $0xd0] sm:$0xff]
        %v682 = vld [vmem:[%s6 + $0xd8] sm:$0xff]
        %v683 = vld [vmem:[%s6 + $0xe0] sm:$0xff]
        %v684 = vld [vmem:[%s6 + $0xe8] sm:$0xff]
        %v685 = vld [vmem:[%s6 + $0xf0] sm:$0xff]
        %v686 = vld [vmem:[%s6 + $0xf8] sm:$0xff]
        %v687 = vld [vmem:[%s379] sm:$0xf]
        %v688 = vld [vmem:[%s379 + $0x4] sm:$0xf]
        %v689 = vld [vmem:[%s379 + $0x8] sm:$0xf]
        %v690 = vld [vmem:[%s379 + $0xc] sm:$0xf]
        %v691 = vld [vmem:[%s379 + $0x10] sm:$0xf]
        %v692 = vld [vmem:[%s379 + $0x14] sm:$0xf]
        %v693 = vld [vmem:[%s379 + $0x18] sm:$0xf]
        %v694 = vld [vmem:[%s379 + $0x1c] sm:$0xf]
        %v695 = vld [vmem:[%s379 + $0x20] sm:$0xf]
        %v696 = vld [vmem:[%s379 + $0x24] sm:$0xf]
        %v697 = vld [vmem:[%s379 + $0x28] sm:$0xf]
        %v698 = vld [vmem:[%s379 + $0x2c] sm:$0xf]
        %v699 = vld [vmem:[%s379 + $0x30] sm:$0xf]
        %v700 = vld [vmem:[%s379 + $0x34] sm:$0xf]
        %v701 = vld [vmem:[%s379 + $0x38] sm:$0xf]
        %v702 = vld [vmem:[%s379 + $0x3c] sm:$0xf]
        %v703 = vld [vmem:[%s379 + $0x40] sm:$0xf]
        %v704 = vld [vmem:[%s379 + $0x44] sm:$0xf]
        %v705 = vld [vmem:[%s379 + $0x48] sm:$0xf]
        %v706 = vld [vmem:[%s379 + $0x4c] sm:$0xf]
        %v707 = vld [vmem:[%s379 + $0x50] sm:$0xf]
        %v708 = vld [vmem:[%s379 + $0x54] sm:$0xf]
        %v709 = vld [vmem:[%s379 + $0x58] sm:$0xf]
        %v710 = vld [vmem:[%s379 + $0x5c] sm:$0xf]
        %v711 = vld [vmem:[%s379 + $0x60] sm:$0xf]
        %v712 = vld [vmem:[%s379 + $0x64] sm:$0xf]
        %v713 = vld [vmem:[%s379 + $0x68] sm:$0xf]
        %v714 = vld [vmem:[%s379 + $0x6c] sm:$0xf]
        %v715 = vld [vmem:[%s379 + $0x70] sm:$0xf]
        %v716 = vld [vmem:[%s379 + $0x74] sm:$0xf]
        %v717 = vld [vmem:[%s379 + $0x78] sm:$0xf]
        %v718 = vld [vmem:[%s379 + $0x7c] sm:$0xf]
        %v719 = vunpack.c.l.bf16 %v687
        %v720 = vunpack.c.l.bf16 %v688
        %v721 = vunpack.c.l.bf16 %v689
        %v722 = vunpack.c.l.bf16 %v690
        %v723 = vunpack.c.l.bf16 %v691
        %v724 = vunpack.c.l.bf16 %v692
        %v725 = vunpack.c.l.bf16 %v693
        %v726 = vunpack.c.l.bf16 %v694
        %v727 = vunpack.c.l.bf16 %v695
        %v728 = vunpack.c.l.bf16 %v696
        %v729 = vunpack.c.l.bf16 %v697
        %v730 = vunpack.c.l.bf16 %v698
        %v731 = vunpack.c.l.bf16 %v699
        %v732 = vunpack.c.l.bf16 %v700
        %v733 = vunpack.c.l.bf16 %v701
        %v734 = vunpack.c.l.bf16 %v702
        %v735 = vunpack.c.l.bf16 %v703
        %v736 = vunpack.c.l.bf16 %v704
        %v737 = vunpack.c.l.bf16 %v705
        %v738 = vunpack.c.l.bf16 %v706
        %v739 = vunpack.c.l.bf16 %v707
        %v740 = vunpack.c.l.bf16 %v708
        %v741 = vunpack.c.l.bf16 %v709
        %v742 = vunpack.c.l.bf16 %v710
        %v743 = vunpack.c.l.bf16 %v711
        %v744 = vunpack.c.l.bf16 %v712
        %v745 = vunpack.c.l.bf16 %v713
        %v746 = vunpack.c.l.bf16 %v714
        %v747 = vunpack.c.l.bf16 %v715
        %v748 = vunpack.c.l.bf16 %v716
        %v749 = vunpack.c.l.bf16 %v717
        %v750 = vunpack.c.l.bf16 %v718
        %vm751 = vcmask 130048
        %v753 = vsel %vm751, %v655, 0
        %v756 = vsel %vm751, %v656, 0
        %v759 = vsel %vm751, %v657, 0
        %v762 = vsel %vm751, %v658, 0
        %v765 = vsel %vm751, %v659, 0
        %v768 = vsel %vm751, %v660, 0
        %v771 = vsel %vm751, %v661, 0
        %v774 = vsel %vm751, %v662, 0
        %v777 = vsel %vm751, %v663, 0
        %v780 = vsel %vm751, %v664, 0
        %v783 = vsel %vm751, %v665, 0
        %v786 = vsel %vm751, %v666, 0
        %v789 = vsel %vm751, %v667, 0
        %v792 = vsel %vm751, %v668, 0
        %v795 = vsel %vm751, %v669, 0
        %v798 = vsel %vm751, %v670, 0
        %v801 = vsel %vm751, %v671, 0
        %v804 = vsel %vm751, %v672, 0
        %v807 = vsel %vm751, %v673, 0
        %v810 = vsel %vm751, %v674, 0
        %v813 = vsel %vm751, %v675, 0
        %v816 = vsel %vm751, %v676, 0
        %v819 = vsel %vm751, %v677, 0
        %v822 = vsel %vm751, %v678, 0
        %v825 = vsel %vm751, %v679, 0
        %v828 = vsel %vm751, %v680, 0
        %v831 = vsel %vm751, %v681, 0
        %v834 = vsel %vm751, %v682, 0
        %v837 = vsel %vm751, %v683, 0
        %v840 = vsel %vm751, %v684, 0
        %v843 = vsel %vm751, %v685, 0
        %v846 = vsel %vm751, %v686, 0
        %848 = vmatprep.subr.mxu0 0.0
        %849 = vmatpush1.msra.mxu0 %v529
        %850 = vmatprep.subr.mxu0 0.0
        %851 = vmatpush1.msra.mxu0 %v532
        %852 = vmatprep.subr.mxu0 0.0
        %853 = vmatpush1.msra.mxu0 0.0
        %854 = vmatprep.subr.mxu0 0.0
        %855 = vmatpush1.msra.mxu0 0.0
        %856 = vmatprep.subr.mxu0 0.0
        %857 = vmatpush1.msra.mxu0 0.0
        %858 = vmatprep.subr.mxu0 0.0
        %859 = vmatpush1.msra.mxu0 0.0
        %860 = vmatprep.subr.mxu0 0.0
        %861 = vmatpush1.msra.mxu0 0.0
        %862 = vmatprep.subr.mxu0 0.0
        %863 = vmatpush1.msra.mxu0 0.0
        %864 = vmatprep.subr.mxu0 0.0
        %865 = vmatpush1.msra.mxu0 0.0
        %866 = vmatprep.subr.mxu0 0.0
        %867 = vmatpush1.msra.mxu0 0.0
        %868 = vmatprep.subr.mxu0 0.0
        %869 = vmatpush1.msra.mxu0 0.0
        %870 = vmatprep.subr.mxu0 0.0
        %871 = vmatpush1.msra.mxu0 0.0
        %872 = vmatprep.subr.mxu0 0.0
        %873 = vmatpush1.msra.mxu0 0.0
        %874 = vmatprep.subr.mxu0 0.0
        %875 = vmatpush1.msra.mxu0 0.0
        %876 = vmatprep.subr.mxu0 0.0
        %877 = vmatpush1.msra.mxu0 0.0
        %878 = vmatprep.subr.mxu0 0.0
        %879 = vmatpush1.msra.mxu0 0.0
        %880 = vmatprep.subr.mxu0 0.0
        %881 = vmatpush1.msra.mxu0 0.0
        %882 = vmatprep.subr.mxu0 0.0
        %883 = vmatpush1.msra.mxu0 0.0
        %884 = vmatprep.subr.mxu0 0.0
        %885 = vmatpush1.msra.mxu0 0.0
        %886 = vmatprep.subr.mxu0 0.0
        %887 = vmatpush1.msra.mxu0 0.0
        %888 = vmatprep.subr.mxu0 0.0
        %889 = vmatpush1.msra.mxu0 0.0
        %890 = vmatprep.subr.mxu0 0.0
        %891 = vmatpush1.msra.mxu0 0.0
        %892 = vmatprep.subr.mxu0 0.0
        %893 = vmatpush1.msra.mxu0 0.0
        %894 = vmatprep.subr.mxu0 0.0
        %895 = vmatpush1.msra.mxu0 0.0
        %896 = vmatprep.subr.mxu0 0.0
        %897 = vmatpush1.msra.mxu0 0.0
        %898 = vmatprep.subr.mxu0 0.0
        %899 = vmatpush1.msra.mxu0 0.0
        %900 = vmatprep.subr.mxu0 0.0
        %901 = vmatpush1.msra.mxu0 0.0
        %902 = vmatprep.subr.mxu0 0.0
        %903 = vmatpush1.msra.mxu0 0.0
        %904 = vmatprep.subr.mxu0 0.0
        %905 = vmatpush1.msra.mxu0 0.0
        %906 = vmatprep.subr.mxu0 0.0
        %907 = vmatpush1.msra.mxu0 0.0
        %908 = vmatprep.subr.mxu0 0.0
        %909 = vmatpush1.msra.mxu0 0.0
        %910 = vmatprep.subr.mxu0 0.0
        %911 = vmatpush1.msra.mxu0 0.0
        %912 = vmatprep.mubr.f32.mxu0 0.0
        %913 = vmatmul.mubr.f32.gmra.mrb[0].mxu0 %v753
        %v914 = vpop.f32.mrb[0].mxu0
        %v915 = vadd.f32 %v719, %v914
        %v916 = vpop.f32.mrb[0].mxu0
        %917 = vmatprep.mubr.f32.mxu0 0.0
        %918 = vmatmul.mubr.f32.gmra.mrb[0].mxu0 %v756
        %v919 = vpop.f32.mrb[0].mxu0
        %v920 = vadd.f32 %v720, %v919
        %v921 = vpop.f32.mrb[0].mxu0
        %922 = vmatprep.mubr.f32.mxu0 0.0
        %923 = vmatmul.mubr.f32.gmra.mrb[0].mxu0 %v759
        %v924 = vpop.f32.mrb[0].mxu0
        %v925 = vadd.f32 %v721, %v924
        %v926 = vpop.f32.mrb[0].mxu0
        %927 = vmatprep.mubr.f32.mxu0 0.0
        %928 = vmatmul.mubr.f32.gmra.mrb[0].mxu0 %v762
        %v929 = vpop.f32.mrb[0].mxu0
        %v930 = vadd.f32 %v722, %v929
        %v931 = vpop.f32.mrb[0].mxu0
        %932 = vmatprep.mubr.f32.mxu0 0.0
        %933 = vmatmul.mubr.f32.gmra.mrb[0].mxu0 %v765
        %v934 = vpop.f32.mrb[0].mxu0
        %v935 = vadd.f32 %v723, %v934
        %v936 = vpop.f32.mrb[0].mxu0
        %937 = vmatprep.mubr.f32.mxu0 0.0
        %938 = vmatmul.mubr.f32.gmra.mrb[0].mxu0 %v768
        %v939 = vpop.f32.mrb[0].mxu0
        %v940 = vadd.f32 %v724, %v939
        %v941 = vpop.f32.mrb[0].mxu0
        %942 = vmatprep.mubr.f32.mxu0 0.0
        %943 = vmatmul.mubr.f32.gmra.mrb[0].mxu0 %v771
        %v944 = vpop.f32.mrb[0].mxu0
        %v945 = vadd.f32 %v725, %v944
        %v946 = vpop.f32.mrb[0].mxu0
        %947 = vmatprep.mubr.f32.mxu0 0.0
        %948 = vmatmul.mubr.f32.gmra.mrb[0].mxu0 %v774
        %v949 = vpop.f32.mrb[0].mxu0
        %v950 = vadd.f32 %v726, %v949
        %v951 = vpop.f32.mrb[0].mxu0
        %952 = vmatprep.mubr.f32.mxu0 0.0
        %953 = vmatmul.mubr.f32.gmra.mrb[0].mxu0 %v777
        %v954 = vpop.f32.mrb[0].mxu0
        %v955 = vadd.f32 %v727, %v954
        %v956 = vpop.f32.mrb[0].mxu0
        %957 = vmatprep.mubr.f32.mxu0 0.0
        %958 = vmatmul.mubr.f32.gmra.mrb[0].mxu0 %v780
        %v959 = vpop.f32.mrb[0].mxu0
        %v960 = vadd.f32 %v728, %v959
        %v961 = vpop.f32.mrb[0].mxu0
        %962 = vmatprep.mubr.f32.mxu0 0.0
        %963 = vmatmul.mubr.f32.gmra.mrb[0].mxu0 %v783
        %v964 = vpop.f32.mrb[0].mxu0
        %v965 = vadd.f32 %v729, %v964
        %v966 = vpop.f32.mrb[0].mxu0
        %967 = vmatprep.mubr.f32.mxu0 0.0
        %968 = vmatmul.mubr.f32.gmra.mrb[0].mxu0 %v786
        %v969 = vpop.f32.mrb[0].mxu0
        %v970 = vadd.f32 %v730, %v969
        %v971 = vpop.f32.mrb[0].mxu0
        %972 = vmatprep.mubr.f32.mxu0 0.0
        %973 = vmatmul.mubr.f32.gmra.mrb[0].mxu0 %v789
        %v974 = vpop.f32.mrb[0].mxu0
        %v975 = vadd.f32 %v731, %v974
        %v976 = vpop.f32.mrb[0].mxu0
        %977 = vmatprep.mubr.f32.mxu0 0.0
        %978 = vmatmul.mubr.f32.gmra.mrb[0].mxu0 %v792
        %v979 = vpop.f32.mrb[0].mxu0
        %v980 = vadd.f32 %v732, %v979
        %v981 = vpop.f32.mrb[0].mxu0
        %982 = vmatprep.mubr.f32.mxu0 0.0
        %983 = vmatmul.mubr.f32.gmra.mrb[0].mxu0 %v795
        %v984 = vpop.f32.mrb[0].mxu0
        %v985 = vadd.f32 %v733, %v984
        %v986 = vpop.f32.mrb[0].mxu0
        %987 = vmatprep.mubr.f32.mxu0 0.0
        %988 = vmatmul.mubr.f32.gmra.mrb[0].mxu0 %v798
        %v989 = vpop.f32.mrb[0].mxu0
        %v990 = vadd.f32 %v734, %v989
        %v991 = vpop.f32.mrb[0].mxu0
        %992 = vmatprep.mubr.f32.mxu0 0.0
        %993 = vmatmul.mubr.f32.gmra.mrb[0].mxu0 %v801
        %v994 = vpop.f32.mrb[0].mxu0
        %v995 = vadd.f32 %v735, %v994
        %v996 = vpop.f32.mrb[0].mxu0
        %997 = vmatprep.mubr.f32.mxu0 0.0
        %998 = vmatmul.mubr.f32.gmra.mrb[0].mxu0 %v804
        %v999 = vpop.f32.mrb[0].mxu0
        %v1000 = vadd.f32 %v736, %v999
        %v1001 = vpop.f32.mrb[0].mxu0
        %1002 = vmatprep.mubr.f32.mxu0 0.0
        %1003 = vmatmul.mubr.f32.gmra.mrb[0].mxu0 %v807
        %v1004 = vpop.f32.mrb[0].mxu0
        %v1005 = vadd.f32 %v737, %v1004
        %v1006 = vpop.f32.mrb[0].mxu0
        %1007 = vmatprep.mubr.f32.mxu0 0.0
        %1008 = vmatmul.mubr.f32.gmra.mrb[0].mxu0 %v810
        %v1009 = vpop.f32.mrb[0].mxu0
        %v1010 = vadd.f32 %v738, %v1009
        %v1011 = vpop.f32.mrb[0].mxu0
        %1012 = vmatprep.mubr.f32.mxu0 0.0
        %1013 = vmatmul.mubr.f32.gmra.mrb[0].mxu0 %v813
        %v1014 = vpop.f32.mrb[0].mxu0
        %v1015 = vadd.f32 %v739, %v1014
        %v1016 = vpop.f32.mrb[0].mxu0
        %1017 = vmatprep.mubr.f32.mxu0 0.0
        %1018 = vmatmul.mubr.f32.gmra.mrb[0].mxu0 %v816
        %v1019 = vpop.f32.mrb[0].mxu0
        %v1020 = vadd.f32 %v740, %v1019
        %v1021 = vpop.f32.mrb[0].mxu0
        %1022 = vmatprep.mubr.f32.mxu0 0.0
        %1023 = vmatmul.mubr.f32.gmra.mrb[0].mxu0 %v819
        %v1024 = vpop.f32.mrb[0].mxu0
        %v1025 = vadd.f32 %v741, %v1024
        %v1026 = vpop.f32.mrb[0].mxu0
        %1027 = vmatprep.mubr.f32.mxu0 0.0
        %1028 = vmatmul.mubr.f32.gmra.mrb[0].mxu0 %v822
        %v1029 = vpop.f32.mrb[0].mxu0
        %v1030 = vadd.f32 %v742, %v1029
        %v1031 = vpop.f32.mrb[0].mxu0
        %1032 = vmatprep.mubr.f32.mxu0 0.0
        %1033 = vmatmul.mubr.f32.gmra.mrb[0].mxu0 %v825
        %v1034 = vpop.f32.mrb[0].mxu0
        %v1035 = vadd.f32 %v743, %v1034
        %v1036 = vpop.f32.mrb[0].mxu0
        %1037 = vmatprep.mubr.f32.mxu0 0.0
        %1038 = vmatmul.mubr.f32.gmra.mrb[0].mxu0 %v828
        %v1039 = vpop.f32.mrb[0].mxu0
        %v1040 = vadd.f32 %v744, %v1039
        %v1041 = vpop.f32.mrb[0].mxu0
        %1042 = vmatprep.mubr.f32.mxu0 0.0
        %1043 = vmatmul.mubr.f32.gmra.mrb[0].mxu0 %v831
        %v1044 = vpop.f32.mrb[0].mxu0
        %v1045 = vadd.f32 %v745, %v1044
        %v1046 = vpop.f32.mrb[0].mxu0
        %1047 = vmatprep.mubr.f32.mxu0 0.0
        %1048 = vmatmul.mubr.f32.gmra.mrb[0].mxu0 %v834
        %v1049 = vpop.f32.mrb[0].mxu0
        %v1050 = vadd.f32 %v746, %v1049
        %v1051 = vpop.f32.mrb[0].mxu0
        %1052 = vmatprep.mubr.f32.mxu0 0.0
        %1053 = vmatmul.mubr.f32.gmra.mrb[0].mxu0 %v837
        %v1054 = vpop.f32.mrb[0].mxu0
        %v1055 = vadd.f32 %v747, %v1054
        %v1056 = vpop.f32.mrb[0].mxu0
        %1057 = vmatprep.mubr.f32.mxu0 0.0
        %1058 = vmatmul.mubr.f32.gmra.mrb[0].mxu0 %v840
        %v1059 = vpop.f32.mrb[0].mxu0
        %v1060 = vadd.f32 %v748, %v1059
        %v1061 = vpop.f32.mrb[0].mxu0
        %1062 = vmatprep.mubr.f32.mxu0 0.0
        %1063 = vmatmul.mubr.f32.gmra.mrb[0].mxu0 %v843
        %v1064 = vpop.f32.mrb[0].mxu0
        %v1065 = vadd.f32 %v749, %v1064
        %v1066 = vpop.f32.mrb[0].mxu0
        %1067 = vmatprep.mubr.f32.mxu0 0.0
        %1068 = vmatmul.mubr.f32.gmra.mrb[0].mxu0 %v846
        %v1069 = vpop.f32.mrb[0].mxu0
        %v1070 = vadd.f32 %v750, %v1069
        %v1071 = vpop.f32.mrb[0].mxu0
        %1072 = vdwg.mxu0
        %v1073 = vmax.f32 %v915, %v935
        %v1074 = vmax.f32 %v920, %v940
        %v1075 = vmax.f32 %v925, %v945
        %v1076 = vmax.f32 %v930, %v950
        %v1077 = vmax.f32 %v1073, %v955
        %v1078 = vmax.f32 %v1074, %v960
        %v1079 = vmax.f32 %v1075, %v965
        %v1080 = vmax.f32 %v1076, %v970
        %v1081 = vmax.f32 %v1077, %v975
        %v1082 = vmax.f32 %v1078, %v980
        %v1083 = vmax.f32 %v1079, %v985
        %v1084 = vmax.f32 %v1080, %v990
        %v1085 = vmax.f32 %v1081, %v995
        %v1086 = vmax.f32 %v1082, %v1000
        %v1087 = vmax.f32 %v1083, %v1005
        %v1088 = vmax.f32 %v1084, %v1010
        %v1089 = vmax.f32 %v1085, %v1015
        %v1090 = vmax.f32 %v1086, %v1020
        %v1091 = vmax.f32 %v1087, %v1025
        %v1092 = vmax.f32 %v1088, %v1030
        %v1093 = vmax.f32 %v1089, %v1035
        %v1094 = vmax.f32 %v1090, %v1040
        %v1095 = vmax.f32 %v1091, %v1045
        %v1096 = vmax.f32 %v1092, %v1050
        %v1097 = vmax.f32 %v1093, %v1055
        %v1098 = vmax.f32 %v1094, %v1060
        %v1099 = vmax.f32 %v1095, %v1065
        %v1100 = vmax.f32 %v1096, %v1070
        %v1101 = vmax.f32 %v1097, %v1098
        %v1102 = vmax.f32 %v1099, %v1100
        %v1103 = vmax.f32 %v1101, %v1102
        %v1104 = vrot.slane %v1103, 4
        %v1105 = vmax.f32 %v1103, %v1104
        %v1106 = vrot.slane %v1105, 2
        %v1107 = vmax.f32 %v1105, %v1106
        %v1108 = vrot.slane %v1107, 1
        %v1109 = vmax.f32 %v1107, %v1108
        %v1110 = vsub.f32 %v915, %v1109
        %v1111 = vsub.f32 %v920, %v1109
        %v1112 = vsub.f32 %v925, %v1109
        %v1113 = vsub.f32 %v930, %v1109
        %v1114 = vsub.f32 %v935, %v1109
        %v1115 = vsub.f32 %v940, %v1109
        %v1116 = vsub.f32 %v945, %v1109
        %v1117 = vsub.f32 %v950, %v1109
        %v1118 = vsub.f32 %v955, %v1109
        %v1119 = vsub.f32 %v960, %v1109
        %v1120 = vsub.f32 %v965, %v1109
        %v1121 = vsub.f32 %v970, %v1109
        %v1122 = vsub.f32 %v975, %v1109
        %v1123 = vsub.f32 %v980, %v1109
        %v1124 = vsub.f32 %v985, %v1109
        %v1125 = vsub.f32 %v990, %v1109
        %v1126 = vsub.f32 %v995, %v1109
        %v1127 = vsub.f32 %v1000, %v1109
        %v1128 = vsub.f32 %v1005, %v1109
        %v1129 = vsub.f32 %v1010, %v1109
        %v1130 = vsub.f32 %v1015, %v1109
        %v1131 = vsub.f32 %v1020, %v1109
        %v1132 = vsub.f32 %v1025, %v1109
        %v1133 = vsub.f32 %v1030, %v1109
        %v1134 = vsub.f32 %v1035, %v1109
        %v1135 = vsub.f32 %v1040, %v1109
        %v1136 = vsub.f32 %v1045, %v1109
        %v1137 = vsub.f32 %v1050, %v1109
        %v1138 = vsub.f32 %v1055, %v1109
        %v1139 = vsub.f32 %v1060, %v1109
        %v1140 = vsub.f32 %v1065, %v1109
        %v1141 = vsub.f32 %v1070, %v1109
        %v1142 = vmul.f32 %v1110, 1.442695
        %v1143 = vpow.pop %v1142
        %v1144 = vmul.f32 %v1111, 1.442695
        %v1145 = vpow.pop %v1144
        %v1146 = vmul.f32 %v1112, 1.442695
        %v1147 = vpow.pop %v1146
        %v1148 = vmul.f32 %v1113, 1.442695
        %v1149 = vpow.pop %v1148
        %v1150 = vmul.f32 %v1114, 1.442695
        %v1151 = vpow.pop %v1150
        %v1152 = vmul.f32 %v1115, 1.442695
        %v1153 = vpow.pop %v1152
        %v1154 = vmul.f32 %v1116, 1.442695
        %v1155 = vpow.pop %v1154
        %v1156 = vmul.f32 %v1117, 1.442695
        %v1157 = vpow.pop %v1156
        %v1158 = vmul.f32 %v1118, 1.442695
        %v1159 = vpow.pop %v1158
        %v1160 = vmul.f32 %v1119, 1.442695
        %v1161 = vpow.pop %v1160
        %v1162 = vmul.f32 %v1120, 1.442695
        %v1163 = vpow.pop %v1162
        %v1164 = vmul.f32 %v1121, 1.442695
        %v1165 = vpow.pop %v1164
        %v1166 = vmul.f32 %v1122, 1.442695
        %v1167 = vpow.pop %v1166
        %v1168 = vmul.f32 %v1123, 1.442695
        %v1169 = vpow.pop %v1168
        %v1170 = vmul.f32 %v1124, 1.442695
        %v1171 = vpow.pop %v1170
        %v1172 = vmul.f32 %v1125, 1.442695
        %v1173 = vpow.pop %v1172
        %v1174 = vmul.f32 %v1126, 1.442695
        %v1175 = vpow.pop %v1174
        %v1176 = vmul.f32 %v1127, 1.442695
        %v1177 = vpow.pop %v1176
        %v1178 = vmul.f32 %v1128, 1.442695
        %v1179 = vpow.pop %v1178
        %v1180 = vmul.f32 %v1129, 1.442695
        %v1181 = vpow.pop %v1180
        %v1182 = vmul.f32 %v1130, 1.442695
        %v1183 = vpow.pop %v1182
        %v1184 = vmul.f32 %v1131, 1.442695
        %v1185 = vpow.pop %v1184
        %v1186 = vmul.f32 %v1132, 1.442695
        %v1187 = vpow.pop %v1186
        %v1188 = vmul.f32 %v1133, 1.442695
        %v1189 = vpow.pop %v1188
        %v1190 = vmul.f32 %v1134, 1.442695
        %v1191 = vpow.pop %v1190
        %v1192 = vmul.f32 %v1135, 1.442695
        %v1193 = vpow.pop %v1192
        %v1194 = vmul.f32 %v1136, 1.442695
        %v1195 = vpow.pop %v1194
        %v1196 = vmul.f32 %v1137, 1.442695
        %v1197 = vpow.pop %v1196
        %v1198 = vmul.f32 %v1138, 1.442695
        %v1199 = vpow.pop %v1198
        %v1200 = vmul.f32 %v1139, 1.442695
        %v1201 = vpow.pop %v1200
        %v1202 = vmul.f32 %v1140, 1.442695
        %v1203 = vpow.pop %v1202
        %v1204 = vmul.f32 %v1141, 1.442695
        %v1205 = vpow.pop %v1204
        %v1206 = vadd.f32 %v1143, %v1145
        %v1207 = vadd.f32 %v1206, %v1147
        %v1208 = vadd.f32 %v1207, %v1149
        %v1209 = vadd.f32 %v1208, %v1151
        %v1210 = vadd.f32 %v1209, %v1153
        %v1211 = vadd.f32 %v1210, %v1155
        %v1212 = vadd.f32 %v1211, %v1157
        %v1213 = vadd.f32 %v1212, %v1159
        %v1214 = vadd.f32 %v1213, %v1161
        %v1215 = vadd.f32 %v1214, %v1163
        %v1216 = vadd.f32 %v1215, %v1165
        %v1217 = vadd.f32 %v1216, %v1167
        %v1218 = vadd.f32 %v1217, %v1169
        %v1219 = vadd.f32 %v1218, %v1171
        %v1220 = vadd.f32 %v1219, %v1173
        %v1221 = vadd.f32 %v1220, %v1175
        %v1222 = vadd.f32 %v1221, %v1177
        %v1223 = vadd.f32 %v1222, %v1179
        %v1224 = vadd.f32 %v1223, %v1181
        %v1225 = vadd.f32 %v1224, %v1183
        %v1226 = vadd.f32 %v1225, %v1185
        %v1227 = vadd.f32 %v1226, %v1187
        %v1228 = vadd.f32 %v1227, %v1189
        %v1229 = vadd.f32 %v1228, %v1191
        %v1230 = vadd.f32 %v1229, %v1193
        %v1231 = vadd.f32 %v1230, %v1195
        %v1232 = vadd.f32 %v1231, %v1197
        %v1233 = vadd.f32 %v1232, %v1199
        %v1234 = vadd.f32 %v1233, %v1201
        %v1235 = vadd.f32 %v1234, %v1203
        %v1236 = vadd.f32 %v1235, %v1205
        %v1237 = vrot.slane %v1236, 4
        %v1238 = vadd.f32 %v1236, %v1237
        %v1239 = vrot.slane %v1238, 2
        %v1240 = vadd.f32 %v1238, %v1239
        %v1241 = vrot.slane %v1240, 1
        %v1242 = vadd.f32 %v1240, %v1241
        %v1243 = vrcp.pop %v1242
        %v1244 = vmul.f32 %v1143, %v1243
        %v1245 = vmul.f32 %v1145, %v1243
        %v1246 = vmul.f32 %v1147, %v1243
        %v1247 = vmul.f32 %v1149, %v1243
        %v1248 = vmul.f32 %v1151, %v1243
        %v1249 = vmul.f32 %v1153, %v1243
        %v1250 = vmul.f32 %v1155, %v1243
        %v1251 = vmul.f32 %v1157, %v1243
        %v1252 = vmul.f32 %v1159, %v1243
        %v1253 = vmul.f32 %v1161, %v1243
        %v1254 = vmul.f32 %v1163, %v1243
        %v1255 = vmul.f32 %v1165, %v1243
        %v1256 = vmul.f32 %v1167, %v1243
        %v1257 = vmul.f32 %v1169, %v1243
        %v1258 = vmul.f32 %v1171, %v1243
        %v1259 = vmul.f32 %v1173, %v1243
        %v1260 = vmul.f32 %v1175, %v1243
        %v1261 = vmul.f32 %v1177, %v1243
        %v1262 = vmul.f32 %v1179, %v1243
        %v1263 = vmul.f32 %v1181, %v1243
        %v1264 = vmul.f32 %v1183, %v1243
        %v1265 = vmul.f32 %v1185, %v1243
        %v1266 = vmul.f32 %v1187, %v1243
        %v1267 = vmul.f32 %v1189, %v1243
        %v1268 = vmul.f32 %v1191, %v1243
        %v1269 = vmul.f32 %v1193, %v1243
        %v1270 = vmul.f32 %v1195, %v1243
        %v1271 = vmul.f32 %v1197, %v1243
        %v1272 = vmul.f32 %v1199, %v1243
        %v1273 = vmul.f32 %v1201, %v1243
        %v1274 = vmul.f32 %v1203, %v1243
        %v1275 = vmul.f32 %v1205, %v1243
        %v1276 = vpack.c.bf16 %v641, %v637
        %v1277 = vpack.c.bf16 %v643, %v639
        %v1278 = vpack.c.bf16 %v1245, %v1244
        %v1279 = vpack.c.bf16 %v1247, %v1246
        %v1280 = vpack.c.bf16 %v1249, %v1248
        %v1281 = vpack.c.bf16 %v1251, %v1250
        %v1282 = vpack.c.bf16 %v1253, %v1252
        %v1283 = vpack.c.bf16 %v1255, %v1254
        %v1284 = vpack.c.bf16 %v1257, %v1256
        %v1285 = vpack.c.bf16 %v1259, %v1258
        %v1286 = vpack.c.bf16 %v1261, %v1260
        %v1287 = vpack.c.bf16 %v1263, %v1262
        %v1288 = vpack.c.bf16 %v1265, %v1264
        %v1289 = vpack.c.bf16 %v1267, %v1266
        %v1290 = vpack.c.bf16 %v1269, %v1268
        %v1291 = vpack.c.bf16 %v1271, %v1270
        %v1292 = vpack.c.bf16 %v1273, %v1272
        %v1293 = vpack.c.bf16 %v1275, %v1274
        %1294 = vmatprep.subr.bf16.mxu0 0
        %1295 = vmatpush1.bf16.msra.mxu0 %v1278
        %1296 = vmatprep.subr.bf16.mxu0 0
        %1297 = vmatpush1.bf16.msra.mxu0 %v1279
        %1298 = vmatprep.subr.bf16.mxu0 0
        %1299 = vmatpush1.bf16.msra.mxu0 %v1280
        %1300 = vmatprep.subr.bf16.mxu0 0
        %1301 = vmatpush1.bf16.msra.mxu0 %v1281
        %1302 = vmatprep.subr.bf16.mxu0 0
        %1303 = vmatpush1.bf16.msra.mxu0 %v1282
        %1304 = vmatprep.subr.bf16.mxu0 0
        %1305 = vmatpush1.bf16.msra.mxu0 %v1283
        %1306 = vmatprep.subr.bf16.mxu0 0
        %1307 = vmatpush1.bf16.msra.mxu0 %v1284
        %1308 = vmatprep.subr.bf16.mxu0 0
        %1309 = vmatpush1.bf16.msra.mxu0 %v1285
        %1310 = vmatprep.subr.bf16.mxu0 0
        %1311 = vmatpush1.bf16.msra.mxu0 %v1286
        %1312 = vmatprep.subr.bf16.mxu0 0
        %1313 = vmatpush1.bf16.msra.mxu0 %v1287
        %1314 = vmatprep.subr.bf16.mxu0 0
        %1315 = vmatpush1.bf16.msra.mxu0 %v1288
        %1316 = vmatprep.subr.bf16.mxu0 0
        %1317 = vmatpush1.bf16.msra.mxu0 %v1289
        %1318 = vmatprep.subr.bf16.mxu0 0
        %1319 = vmatpush1.bf16.msra.mxu0 %v1290
        %1320 = vmatprep.subr.bf16.mxu0 0
        %1321 = vmatpush1.bf16.msra.mxu0 %v1291
        %1322 = vmatprep.subr.bf16.mxu0 0
        %1323 = vmatpush1.bf16.msra.mxu0 %v1292
        %1324 = vmatprep.subr.bf16.mxu0 0
        %1325 = vmatpush1.bf16.msra.mxu0 %v1293
        %1326 = vmatprep.mubr.bf16.mxu0 %v1277
        %1327 = vmatmul.mubr.bf16.gmra.mrb[0].mxu0 %v1276
        %v1328 = vpop.f32.mrb[0].mxu0
        %v1329 = vadd.f32 0.0, %v1328
        %v1330 = vpop.f32.mrb[0].mxu0
        %v1331 = vpop.f32.mrb[0].mxu0
        %v1332 = vadd.f32 0.0, %v1331
        %v1333 = vpop.f32.mrb[0].mxu0
        %1334 = vdwg.mxu0
        %v1335 = vmax.f32 %v1329, 0.0
        %v1336 = vmax.f32 %v1332, 0.0
        %v1337 = vld [vmem:[%s8] sm:$0x3]
        %v1338 = vpack.c.bf16 %v1336, %v1335
        %s1339 = scalar_lea.vmem %s379, 128 [#allocation2]
        %v1340 = vld [vmem:[%s1339] sm:$0xf]
        %v1341 = vld [vmem:[%s1339 + $0x4] sm:$0xf]
        %v1342 = vld [vmem:[%s1339 + $0x8] sm:$0xf]
        %v1343 = vld [vmem:[%s1339 + $0xc] sm:$0xf]
        %v1344 = vld [vmem:[%s1339 + $0x10] sm:$0xf]
        %v1345 = vld [vmem:[%s1339 + $0x14] sm:$0xf]
        %v1346 = vld [vmem:[%s1339 + $0x18] sm:$0xf]
        %v1347 = vld [vmem:[%s1339 + $0x1c] sm:$0xf]
        %v1348 = vld [vmem:[%s1339 + $0x20] sm:$0xf]
        %v1349 = vld [vmem:[%s1339 + $0x24] sm:$0xf]
        %v1350 = vld [vmem:[%s1339 + $0x28] sm:$0xf]
        %v1351 = vld [vmem:[%s1339 + $0x2c] sm:$0xf]
        %v1352 = vld [vmem:[%s1339 + $0x30] sm:$0xf]
        %v1353 = vld [vmem:[%s1339 + $0x34] sm:$0xf]
        %v1354 = vld [vmem:[%s1339 + $0x38] sm:$0xf]
        %v1355 = vld [vmem:[%s1339 + $0x3c] sm:$0xf]
        %v1356 = vld [vmem:[%s1339 + $0x40] sm:$0xf]
        %v1357 = vld [vmem:[%s1339 + $0x44] sm:$0xf]
        %v1358 = vld [vmem:[%s1339 + $0x48] sm:$0xf]
        %v1359 = vld [vmem:[%s1339 + $0x4c] sm:$0xf]
        %v1360 = vld [vmem:[%s1339 + $0x50] sm:$0xf]
        %v1361 = vld [vmem:[%s1339 + $0x54] sm:$0xf]
        %v1362 = vld [vmem:[%s1339 + $0x58] sm:$0xf]
        %v1363 = vld [vmem:[%s1339 + $0x5c] sm:$0xf]
        %v1364 = vld [vmem:[%s1339 + $0x60] sm:$0xf]
        %v1365 = vld [vmem:[%s1339 + $0x64] sm:$0xf]
        %v1366 = vld [vmem:[%s1339 + $0x68] sm:$0xf]
        %v1367 = vld [vmem:[%s1339 + $0x6c] sm:$0xf]
        %v1368 = vld [vmem:[%s1339 + $0x70] sm:$0xf]
        %v1369 = vld [vmem:[%s1339 + $0x74] sm:$0xf]
        %v1370 = vld [vmem:[%s1339 + $0x78] sm:$0xf]
        %v1371 = vld [vmem:[%s1339 + $0x7c] sm:$0xf]
        %v1372 = vunpack.c.l.bf16 %v1340
        %v1373 = vunpack.c.l.bf16 %v1341
        %v1374 = vunpack.c.l.bf16 %v1342
        %v1375 = vunpack.c.l.bf16 %v1343
        %v1376 = vunpack.c.l.bf16 %v1344
        %v1377 = vunpack.c.l.bf16 %v1345
        %v1378 = vunpack.c.l.bf16 %v1346
        %v1379 = vunpack.c.l.bf16 %v1347
        %v1380 = vunpack.c.l.bf16 %v1348
        %v1381 = vunpack.c.l.bf16 %v1349
        %v1382 = vunpack.c.l.bf16 %v1350
        %v1383 = vunpack.c.l.bf16 %v1351
        %v1384 = vunpack.c.l.bf16 %v1352
        %v1385 = vunpack.c.l.bf16 %v1353
        %v1386 = vunpack.c.l.bf16 %v1354
        %v1387 = vunpack.c.l.bf16 %v1355
        %v1388 = vunpack.c.l.bf16 %v1356
        %v1389 = vunpack.c.l.bf16 %v1357
        %v1390 = vunpack.c.l.bf16 %v1358
        %v1391 = vunpack.c.l.bf16 %v1359
        %v1392 = vunpack.c.l.bf16 %v1360
        %v1393 = vunpack.c.l.bf16 %v1361
        %v1394 = vunpack.c.l.bf16 %v1362
        %v1395 = vunpack.c.l.bf16 %v1363
        %v1396 = vunpack.c.l.bf16 %v1364
        %v1397 = vunpack.c.l.bf16 %v1365
        %v1398 = vunpack.c.l.bf16 %v1366
        %v1399 = vunpack.c.l.bf16 %v1367
        %v1400 = vunpack.c.l.bf16 %v1368
        %v1401 = vunpack.c.l.bf16 %v1369
        %v1402 = vunpack.c.l.bf16 %v1370
        %v1403 = vunpack.c.l.bf16 %v1371
        %1404 = vmatprep.subr.mxu0 0.0
        %1405 = vmatpush1.msra.mxu0 %v537
        %1406 = vmatprep.subr.mxu0 0.0
        %1407 = vmatpush1.msra.mxu0 %v540
        %1408 = vmatprep.subr.mxu0 0.0
        %1409 = vmatpush1.msra.mxu0 0.0
        %1410 = vmatprep.subr.mxu0 0.0
        %1411 = vmatpush1.msra.mxu0 0.0
        %1412 = vmatprep.subr.mxu0 0.0
        %1413 = vmatpush1.msra.mxu0 0.0
        %1414 = vmatprep.subr.mxu0 0.0
        %1415 = vmatpush1.msra.mxu0 0.0
        %1416 = vmatprep.subr.mxu0 0.0
        %1417 = vmatpush1.msra.mxu0 0.0
        %1418 = vmatprep.subr.mxu0 0.0
        %1419 = vmatpush1.msra.mxu0 0.0
        %1420 = vmatprep.subr.mxu0 0.0
        %1421 = vmatpush1.msra.mxu0 0.0
        %1422 = vmatprep.subr.mxu0 0.0
        %1423 = vmatpush1.msra.mxu0 0.0
        %1424 = vmatprep.subr.mxu0 0.0
        %1425 = vmatpush1.msra.mxu0 0.0
        %1426 = vmatprep.subr.mxu0 0.0
        %1427 = vmatpush1.msra.mxu0 0.0
        %1428 = vmatprep.subr.mxu0 0.0
        %1429 = vmatpush1.msra.mxu0 0.0
        %1430 = vmatprep.subr.mxu0 0.0
        %1431 = vmatpush1.msra.mxu0 0.0
        %1432 = vmatprep.subr.mxu0 0.0
        %1433 = vmatpush1.msra.mxu0 0.0
        %1434 = vmatprep.subr.mxu0 0.0
        %1435 = vmatpush1.msra.mxu0 0.0
        %1436 = vmatprep.subr.mxu0 0.0
        %1437 = vmatpush1.msra.mxu0 0.0
        %1438 = vmatprep.subr.mxu0 0.0
        %1439 = vmatpush1.msra.mxu0 0.0
        %1440 = vmatprep.subr.mxu0 0.0
        %1441 = vmatpush1.msra.mxu0 0.0
        %1442 = vmatprep.subr.mxu0 0.0
        %1443 = vmatpush1.msra.mxu0 0.0
        %1444 = vmatprep.subr.mxu0 0.0
        %1445 = vmatpush1.msra.mxu0 0.0
        %1446 = vmatprep.subr.mxu0 0.0
        %1447 = vmatpush1.msra.mxu0 0.0
        %1448 = vmatprep.subr.mxu0 0.0
        %1449 = vmatpush1.msra.mxu0 0.0
        %1450 = vmatprep.subr.mxu0 0.0
        %1451 = vmatpush1.msra.mxu0 0.0
        %1452 = vmatprep.subr.mxu0 0.0
        %1453 = vmatpush1.msra.mxu0 0.0
        %1454 = vmatprep.subr.mxu0 0.0
        %1455 = vmatpush1.msra.mxu0 0.0
        %1456 = vmatprep.subr.mxu0 0.0
        %1457 = vmatpush1.msra.mxu0 0.0
        %1458 = vmatprep.subr.mxu0 0.0
        %1459 = vmatpush1.msra.mxu0 0.0
        %1460 = vmatprep.subr.mxu0 0.0
        %1461 = vmatpush1.msra.mxu0 0.0
        %1462 = vmatprep.subr.mxu0 0.0
        %1463 = vmatpush1.msra.mxu0 0.0
        %1464 = vmatprep.subr.mxu0 0.0
        %1465 = vmatpush1.msra.mxu0 0.0
        %1466 = vmatprep.subr.mxu0 0.0
        %1467 = vmatpush1.msra.mxu0 0.0
        %1468 = vmatprep.mubr.f32.mxu0 0.0
        %1469 = vmatmul.mubr.f32.gmra.mrb[0].mxu0 %v753
        %v1470 = vpop.f32.mrb[0].mxu0
        %v1471 = vadd.f32 %v1372, %v1470
        %v1472 = vpop.f32.mrb[0].mxu0
        %1473 = vmatprep.mubr.f32.mxu0 0.0
        %1474 = vmatmul.mubr.f32.gmra.mrb[0].mxu0 %v756
        %v1475 = vpop.f32.mrb[0].mxu0
        %v1476 = vadd.f32 %v1373, %v1475
        %v1477 = vpop.f32.mrb[0].mxu0
        %1478 = vmatprep.mubr.f32.mxu0 0.0
        %1479 = vmatmul.mubr.f32.gmra.mrb[0].mxu0 %v759
        %v1480 = vpop.f32.mrb[0].mxu0
        %v1481 = vadd.f32 %v1374, %v1480
        %v1482 = vpop.f32.mrb[0].mxu0
        %1483 = vmatprep.mubr.f32.mxu0 0.0
        %1484 = vmatmul.mubr.f32.gmra.mrb[0].mxu0 %v762
        %v1485 = vpop.f32.mrb[0].mxu0
        %v1486 = vadd.f32 %v1375, %v1485
        %v1487 = vpop.f32.mrb[0].mxu0
        %1488 = vmatprep.mubr.f32.mxu0 0.0
        %1489 = vmatmul.mubr.f32.gmra.mrb[0].mxu0 %v765
        %v1490 = vpop.f32.mrb[0].mxu0
        %v1491 = vadd.f32 %v1376, %v1490
        %v1492 = vpop.f32.mrb[0].mxu0
        %1493 = vmatprep.mubr.f32.mxu0 0.0
        %1494 = vmatmul.mubr.f32.gmra.mrb[0].mxu0 %v768
        %v1495 = vpop.f32.mrb[0].mxu0
        %v1496 = vadd.f32 %v1377, %v1495
        %v1497 = vpop.f32.mrb[0].mxu0
        %1498 = vmatprep.mubr.f32.mxu0 0.0
        %1499 = vmatmul.mubr.f32.gmra.mrb[0].mxu0 %v771
        %v1500 = vpop.f32.mrb[0].mxu0
        %v1501 = vadd.f32 %v1378, %v1500
        %v1502 = vpop.f32.mrb[0].mxu0
        %1503 = vmatprep.mubr.f32.mxu0 0.0
        %1504 = vmatmul.mubr.f32.gmra.mrb[0].mxu0 %v774
        %v1505 = vpop.f32.mrb[0].mxu0
        %v1506 = vadd.f32 %v1379, %v1505
        %v1507 = vpop.f32.mrb[0].mxu0
        %1508 = vmatprep.mubr.f32.mxu0 0.0
        %1509 = vmatmul.mubr.f32.gmra.mrb[0].mxu0 %v777
        %v1510 = vpop.f32.mrb[0].mxu0
        %v1511 = vadd.f32 %v1380, %v1510
        %v1512 = vpop.f32.mrb[0].mxu0
        %1513 = vmatprep.mubr.f32.mxu0 0.0
        %1514 = vmatmul.mubr.f32.gmra.mrb[0].mxu0 %v780
        %v1515 = vpop.f32.mrb[0].mxu0
        %v1516 = vadd.f32 %v1381, %v1515
        %v1517 = vpop.f32.mrb[0].mxu0
        %1518 = vmatprep.mubr.f32.mxu0 0.0
        %1519 = vmatmul.mubr.f32.gmra.mrb[0].mxu0 %v783
        %v1520 = vpop.f32.mrb[0].mxu0
        %v1521 = vadd.f32 %v1382, %v1520
        %v1522 = vpop.f32.mrb[0].mxu0
        %1523 = vmatprep.mubr.f32.mxu0 0.0
        %1524 = vmatmul.mubr.f32.gmra.mrb[0].mxu0 %v786
        %v1525 = vpop.f32.mrb[0].mxu0
        %v1526 = vadd.f32 %v1383, %v1525
        %v1527 = vpop.f32.mrb[0].mxu0
        %1528 = vmatprep.mubr.f32.mxu0 0.0
        %1529 = vmatmul.mubr.f32.gmra.mrb[0].mxu0 %v789
        %v1530 = vpop.f32.mrb[0].mxu0
        %v1531 = vadd.f32 %v1384, %v1530
        %v1532 = vpop.f32.mrb[0].mxu0
        %1533 = vmatprep.mubr.f32.mxu0 0.0
        %1534 = vmatmul.mubr.f32.gmra.mrb[0].mxu0 %v792
        %v1535 = vpop.f32.mrb[0].mxu0
        %v1536 = vadd.f32 %v1385, %v1535
        %v1537 = vpop.f32.mrb[0].mxu0
        %1538 = vmatprep.mubr.f32.mxu0 0.0
        %1539 = vmatmul.mubr.f32.gmra.mrb[0].mxu0 %v795
        %v1540 = vpop.f32.mrb[0].mxu0
        %v1541 = vadd.f32 %v1386, %v1540
        %v1542 = vpop.f32.mrb[0].mxu0
        %1543 = vmatprep.mubr.f32.mxu0 0.0
        %1544 = vmatmul.mubr.f32.gmra.mrb[0].mxu0 %v798
        %v1545 = vpop.f32.mrb[0].mxu0
        %v1546 = vadd.f32 %v1387, %v1545
        %v1547 = vpop.f32.mrb[0].mxu0
        %1548 = vmatprep.mubr.f32.mxu0 0.0
        %1549 = vmatmul.mubr.f32.gmra.mrb[0].mxu0 %v801
        %v1550 = vpop.f32.mrb[0].mxu0
        %v1551 = vadd.f32 %v1388, %v1550
        %v1552 = vpop.f32.mrb[0].mxu0
        %1553 = vmatprep.mubr.f32.mxu0 0.0
        %1554 = vmatmul.mubr.f32.gmra.mrb[0].mxu0 %v804
        %v1555 = vpop.f32.mrb[0].mxu0
        %v1556 = vadd.f32 %v1389, %v1555
        %v1557 = vpop.f32.mrb[0].mxu0
        %1558 = vmatprep.mubr.f32.mxu0 0.0
        %1559 = vmatmul.mubr.f32.gmra.mrb[0].mxu0 %v807
        %v1560 = vpop.f32.mrb[0].mxu0
        %v1561 = vadd.f32 %v1390, %v1560
        %v1562 = vpop.f32.mrb[0].mxu0
        %1563 = vmatprep.mubr.f32.mxu0 0.0
        %1564 = vmatmul.mubr.f32.gmra.mrb[0].mxu0 %v810
        %v1565 = vpop.f32.mrb[0].mxu0
        %v1566 = vadd.f32 %v1391, %v1565
        %v1567 = vpop.f32.mrb[0].mxu0
        %1568 = vmatprep.mubr.f32.mxu0 0.0
        %1569 = vmatmul.mubr.f32.gmra.mrb[0].mxu0 %v813
        %v1570 = vpop.f32.mrb[0].mxu0
        %v1571 = vadd.f32 %v1392, %v1570
        %v1572 = vpop.f32.mrb[0].mxu0
        %1573 = vmatprep.mubr.f32.mxu0 0.0
        %1574 = vmatmul.mubr.f32.gmra.mrb[0].mxu0 %v816
        %v1575 = vpop.f32.mrb[0].mxu0
        %v1576 = vadd.f32 %v1393, %v1575
        %v1577 = vpop.f32.mrb[0].mxu0
        %1578 = vmatprep.mubr.f32.mxu0 0.0
        %1579 = vmatmul.mubr.f32.gmra.mrb[0].mxu0 %v819
        %v1580 = vpop.f32.mrb[0].mxu0
        %v1581 = vadd.f32 %v1394, %v1580
        %v1582 = vpop.f32.mrb[0].mxu0
        %1583 = vmatprep.mubr.f32.mxu0 0.0
        %1584 = vmatmul.mubr.f32.gmra.mrb[0].mxu0 %v822
        %v1585 = vpop.f32.mrb[0].mxu0
        %v1586 = vadd.f32 %v1395, %v1585
        %v1587 = vpop.f32.mrb[0].mxu0
        %1588 = vmatprep.mubr.f32.mxu0 0.0
        %1589 = vmatmul.mubr.f32.gmra.mrb[0].mxu0 %v825
        %v1590 = vpop.f32.mrb[0].mxu0
        %v1591 = vadd.f32 %v1396, %v1590
        %v1592 = vpop.f32.mrb[0].mxu0
        %1593 = vmatprep.mubr.f32.mxu0 0.0
        %1594 = vmatmul.mubr.f32.gmra.mrb[0].mxu0 %v828
        %v1595 = vpop.f32.mrb[0].mxu0
        %v1596 = vadd.f32 %v1397, %v1595
        %v1597 = vpop.f32.mrb[0].mxu0
        %1598 = vmatprep.mubr.f32.mxu0 0.0
        %1599 = vmatmul.mubr.f32.gmra.mrb[0].mxu0 %v831
        %v1600 = vpop.f32.mrb[0].mxu0
        %v1601 = vadd.f32 %v1398, %v1600
        %v1602 = vpop.f32.mrb[0].mxu0
        %1603 = vmatprep.mubr.f32.mxu0 0.0
        %1604 = vmatmul.mubr.f32.gmra.mrb[0].mxu0 %v834
        %v1605 = vpop.f32.mrb[0].mxu0
        %v1606 = vadd.f32 %v1399, %v1605
        %v1607 = vpop.f32.mrb[0].mxu0
        %1608 = vmatprep.mubr.f32.mxu0 0.0
        %1609 = vmatmul.mubr.f32.gmra.mrb[0].mxu0 %v837
        %v1610 = vpop.f32.mrb[0].mxu0
        %v1611 = vadd.f32 %v1400, %v1610
        %v1612 = vpop.f32.mrb[0].mxu0
        %1613 = vmatprep.mubr.f32.mxu0 0.0
        %1614 = vmatmul.mubr.f32.gmra.mrb[0].mxu0 %v840
        %v1615 = vpop.f32.mrb[0].mxu0
        %v1616 = vadd.f32 %v1401, %v1615
        %v1617 = vpop.f32.mrb[0].mxu0
        %1618 = vmatprep.mubr.f32.mxu0 0.0
        %1619 = vmatmul.mubr.f32.gmra.mrb[0].mxu0 %v843
        %v1620 = vpop.f32.mrb[0].mxu0
        %v1621 = vadd.f32 %v1402, %v1620
        %v1622 = vpop.f32.mrb[0].mxu0
        %1623 = vmatprep.mubr.f32.mxu0 0.0
        %1624 = vmatmul.mubr.f32.gmra.mrb[0].mxu0 %v846
        %v1625 = vpop.f32.mrb[0].mxu0
        %v1626 = vadd.f32 %v1403, %v1625
        %v1627 = vpop.f32.mrb[0].mxu0
        %1628 = vdwg.mxu0
        %v1629 = vmax.f32 %v1471, %v1491
        %v1630 = vmax.f32 %v1476, %v1496
        %v1631 = vmax.f32 %v1481, %v1501
        %v1632 = vmax.f32 %v1486, %v1506
        %v1633 = vmax.f32 %v1629, %v1511
        %v1634 = vmax.f32 %v1630, %v1516
        %v1635 = vmax.f32 %v1631, %v1521
        %v1636 = vmax.f32 %v1632, %v1526
        %v1637 = vmax.f32 %v1633, %v1531
        %v1638 = vmax.f32 %v1634, %v1536
        %v1639 = vmax.f32 %v1635, %v1541
        %v1640 = vmax.f32 %v1636, %v1546
        %v1641 = vmax.f32 %v1637, %v1551
        %v1642 = vmax.f32 %v1638, %v1556
        %v1643 = vmax.f32 %v1639, %v1561
        %v1644 = vmax.f32 %v1640, %v1566
        %v1645 = vmax.f32 %v1641, %v1571
        %v1646 = vmax.f32 %v1642, %v1576
        %v1647 = vmax.f32 %v1643, %v1581
        %v1648 = vmax.f32 %v1644, %v1586
        %v1649 = vmax.f32 %v1645, %v1591
        %v1650 = vmax.f32 %v1646, %v1596
        %v1651 = vmax.f32 %v1647, %v1601
        %v1652 = vmax.f32 %v1648, %v1606
        %v1653 = vmax.f32 %v1649, %v1611
        %v1654 = vmax.f32 %v1650, %v1616
        %v1655 = vmax.f32 %v1651, %v1621
        %v1656 = vmax.f32 %v1652, %v1626
        %v1657 = vmax.f32 %v1653, %v1654
        %v1658 = vmax.f32 %v1655, %v1656
        %v1659 = vmax.f32 %v1657, %v1658
        %v1660 = vrot.slane %v1659, 4
        %v1661 = vmax.f32 %v1659, %v1660
        %v1662 = vrot.slane %v1661, 2
        %v1663 = vmax.f32 %v1661, %v1662
        %v1664 = vrot.slane %v1663, 1
        %v1665 = vmax.f32 %v1663, %v1664
        %v1666 = vsub.f32 %v1471, %v1665
        %v1667 = vsub.f32 %v1476, %v1665
        %v1668 = vsub.f32 %v1481, %v1665
        %v1669 = vsub.f32 %v1486, %v1665
        %v1670 = vsub.f32 %v1491, %v1665
        %v1671 = vsub.f32 %v1496, %v1665
        %v1672 = vsub.f32 %v1501, %v1665
        %v1673 = vsub.f32 %v1506, %v1665
        %v1674 = vsub.f32 %v1511, %v1665
        %v1675 = vsub.f32 %v1516, %v1665
        %v1676 = vsub.f32 %v1521, %v1665
        %v1677 = vsub.f32 %v1526, %v1665
        %v1678 = vsub.f32 %v1531, %v1665
        %v1679 = vsub.f32 %v1536, %v1665
        %v1680 = vsub.f32 %v1541, %v1665
        %v1681 = vsub.f32 %v1546, %v1665
        %v1682 = vsub.f32 %v1551, %v1665
        %v1683 = vsub.f32 %v1556, %v1665
        %v1684 = vsub.f32 %v1561, %v1665
        %v1685 = vsub.f32 %v1566, %v1665
        %v1686 = vsub.f32 %v1571, %v1665
        %v1687 = vsub.f32 %v1576, %v1665
        %v1688 = vsub.f32 %v1581, %v1665
        %v1689 = vsub.f32 %v1586, %v1665
        %v1690 = vsub.f32 %v1591, %v1665
        %v1691 = vsub.f32 %v1596, %v1665
        %v1692 = vsub.f32 %v1601, %v1665
        %v1693 = vsub.f32 %v1606, %v1665
        %v1694 = vsub.f32 %v1611, %v1665
        %v1695 = vsub.f32 %v1616, %v1665
        %v1696 = vsub.f32 %v1621, %v1665
        %v1697 = vsub.f32 %v1626, %v1665
        %v1698 = vmul.f32 %v1666, 1.442695
        %v1699 = vpow.pop %v1698
        %v1700 = vmul.f32 %v1667, 1.442695
        %v1701 = vpow.pop %v1700
        %v1702 = vmul.f32 %v1668, 1.442695
        %v1703 = vpow.pop %v1702
        %v1704 = vmul.f32 %v1669, 1.442695
        %v1705 = vpow.pop %v1704
        %v1706 = vmul.f32 %v1670, 1.442695
        %v1707 = vpow.pop %v1706
        %v1708 = vmul.f32 %v1671, 1.442695
        %v1709 = vpow.pop %v1708
        %v1710 = vmul.f32 %v1672, 1.442695
        %v1711 = vpow.pop %v1710
        %v1712 = vmul.f32 %v1673, 1.442695
        %v1713 = vpow.pop %v1712
        %v1714 = vmul.f32 %v1674, 1.442695
        %v1715 = vpow.pop %v1714
        %v1716 = vmul.f32 %v1675, 1.442695
        %v1717 = vpow.pop %v1716
        %v1718 = vmul.f32 %v1676, 1.442695
        %v1719 = vpow.pop %v1718
        %v1720 = vmul.f32 %v1677, 1.442695
        %v1721 = vpow.pop %v1720
        %v1722 = vmul.f32 %v1678, 1.442695
        %v1723 = vpow.pop %v1722
        %v1724 = vmul.f32 %v1679, 1.442695
        %v1725 = vpow.pop %v1724
        %v1726 = vmul.f32 %v1680, 1.442695
        %v1727 = vpow.pop %v1726
        %v1728 = vmul.f32 %v1681, 1.442695
        %v1729 = vpow.pop %v1728
        %v1730 = vmul.f32 %v1682, 1.442695
        %v1731 = vpow.pop %v1730
        %v1732 = vmul.f32 %v1683, 1.442695
        %v1733 = vpow.pop %v1732
        %v1734 = vmul.f32 %v1684, 1.442695
        %v1735 = vpow.pop %v1734
        %v1736 = vmul.f32 %v1685, 1.442695
        %v1737 = vpow.pop %v1736
        %v1738 = vmul.f32 %v1686, 1.442695
        %v1739 = vpow.pop %v1738
        %v1740 = vmul.f32 %v1687, 1.442695
        %v1741 = vpow.pop %v1740
        %v1742 = vmul.f32 %v1688, 1.442695
        %v1743 = vpow.pop %v1742
        %v1744 = vmul.f32 %v1689, 1.442695
        %v1745 = vpow.pop %v1744
        %v1746 = vmul.f32 %v1690, 1.442695
        %v1747 = vpow.pop %v1746
        %v1748 = vmul.f32 %v1691, 1.442695
        %v1749 = vpow.pop %v1748
        %v1750 = vmul.f32 %v1692, 1.442695
        %v1751 = vpow.pop %v1750
        %v1752 = vmul.f32 %v1693, 1.442695
        %v1753 = vpow.pop %v1752
        %v1754 = vmul.f32 %v1694, 1.442695
        %v1755 = vpow.pop %v1754
        %v1756 = vmul.f32 %v1695, 1.442695
        %v1757 = vpow.pop %v1756
        %v1758 = vmul.f32 %v1696, 1.442695
        %v1759 = vpow.pop %v1758
        %v1760 = vmul.f32 %v1697, 1.442695
        %v1761 = vpow.pop %v1760
        %v1762 = vadd.f32 %v1699, %v1701
        %v1763 = vadd.f32 %v1762, %v1703
        %v1764 = vadd.f32 %v1763, %v1705
        %v1765 = vadd.f32 %v1764, %v1707
        %v1766 = vadd.f32 %v1765, %v1709
        %v1767 = vadd.f32 %v1766, %v1711
        %v1768 = vadd.f32 %v1767, %v1713
        %v1769 = vadd.f32 %v1768, %v1715
        %v1770 = vadd.f32 %v1769, %v1717
        %v1771 = vadd.f32 %v1770, %v1719
        %v1772 = vadd.f32 %v1771, %v1721
        %v1773 = vadd.f32 %v1772, %v1723
        %v1774 = vadd.f32 %v1773, %v1725
        %v1775 = vadd.f32 %v1774, %v1727
        %v1776 = vadd.f32 %v1775, %v1729
        %v1777 = vadd.f32 %v1776, %v1731
        %v1778 = vadd.f32 %v1777, %v1733
        %v1779 = vadd.f32 %v1778, %v1735
        %v1780 = vadd.f32 %v1779, %v1737
        %v1781 = vadd.f32 %v1780, %v1739
        %v1782 = vadd.f32 %v1781, %v1741
        %v1783 = vadd.f32 %v1782, %v1743
        %v1784 = vadd.f32 %v1783, %v1745
        %v1785 = vadd.f32 %v1784, %v1747
        %v1786 = vadd.f32 %v1785, %v1749
        %v1787 = vadd.f32 %v1786, %v1751
        %v1788 = vadd.f32 %v1787, %v1753
        %v1789 = vadd.f32 %v1788, %v1755
        %v1790 = vadd.f32 %v1789, %v1757
        %v1791 = vadd.f32 %v1790, %v1759
        %v1792 = vadd.f32 %v1791, %v1761
        %v1793 = vrot.slane %v1792, 4
        %v1794 = vadd.f32 %v1792, %v1793
        %v1795 = vrot.slane %v1794, 2
        %v1796 = vadd.f32 %v1794, %v1795
        %v1797 = vrot.slane %v1796, 1
        %v1798 = vadd.f32 %v1796, %v1797
        %v1799 = vrcp.pop %v1798
        %v1800 = vmul.f32 %v1699, %v1799
        %v1801 = vmul.f32 %v1701, %v1799
        %v1802 = vmul.f32 %v1703, %v1799
        %v1803 = vmul.f32 %v1705, %v1799
        %v1804 = vmul.f32 %v1707, %v1799
        %v1805 = vmul.f32 %v1709, %v1799
        %v1806 = vmul.f32 %v1711, %v1799
        %v1807 = vmul.f32 %v1713, %v1799
        %v1808 = vmul.f32 %v1715, %v1799
        %v1809 = vmul.f32 %v1717, %v1799
        %v1810 = vmul.f32 %v1719, %v1799
        %v1811 = vmul.f32 %v1721, %v1799
        %v1812 = vmul.f32 %v1723, %v1799
        %v1813 = vmul.f32 %v1725, %v1799
        %v1814 = vmul.f32 %v1727, %v1799
        %v1815 = vmul.f32 %v1729, %v1799
        %v1816 = vmul.f32 %v1731, %v1799
        %v1817 = vmul.f32 %v1733, %v1799
        %v1818 = vmul.f32 %v1735, %v1799
        %v1819 = vmul.f32 %v1737, %v1799
        %v1820 = vmul.f32 %v1739, %v1799
        %v1821 = vmul.f32 %v1741, %v1799
        %v1822 = vmul.f32 %v1743, %v1799
        %v1823 = vmul.f32 %v1745, %v1799
        %v1824 = vmul.f32 %v1747, %v1799
        %v1825 = vmul.f32 %v1749, %v1799
        %v1826 = vmul.f32 %v1751, %v1799
        %v1827 = vmul.f32 %v1753, %v1799
        %v1828 = vmul.f32 %v1755, %v1799
        %v1829 = vmul.f32 %v1757, %v1799
        %v1830 = vmul.f32 %v1759, %v1799
        %v1831 = vmul.f32 %v1761, %v1799
        %v1832 = vpack.c.bf16 %v651, %v647
        %v1833 = vpack.c.bf16 %v653, %v649
        %v1834 = vpack.c.bf16 %v1801, %v1800
        %v1835 = vpack.c.bf16 %v1803, %v1802
        %v1836 = vpack.c.bf16 %v1805, %v1804
        %v1837 = vpack.c.bf16 %v1807, %v1806
        %v1838 = vpack.c.bf16 %v1809, %v1808
        %v1839 = vpack.c.bf16 %v1811, %v1810
        %v1840 = vpack.c.bf16 %v1813, %v1812
        %v1841 = vpack.c.bf16 %v1815, %v1814
        %v1842 = vpack.c.bf16 %v1817, %v1816
        %v1843 = vpack.c.bf16 %v1819, %v1818
        %v1844 = vpack.c.bf16 %v1821, %v1820
        %v1845 = vpack.c.bf16 %v1823, %v1822
        %v1846 = vpack.c.bf16 %v1825, %v1824
        %v1847 = vpack.c.bf16 %v1827, %v1826
        %v1848 = vpack.c.bf16 %v1829, %v1828
        %v1849 = vpack.c.bf16 %v1831, %v1830
        %1850 = vmatprep.subr.bf16.mxu0 0
        %1851 = vmatpush1.bf16.msra.mxu0 %v1834
        %1852 = vmatprep.subr.bf16.mxu0 0
        %1853 = vmatpush1.bf16.msra.mxu0 %v1835
        %1854 = vmatprep.subr.bf16.mxu0 0
        %1855 = vmatpush1.bf16.msra.mxu0 %v1836
        %1856 = vmatprep.subr.bf16.mxu0 0
        %1857 = vmatpush1.bf16.msra.mxu0 %v1837
        %1858 = vmatprep.subr.bf16.mxu0 0
        %1859 = vmatpush1.bf16.msra.mxu0 %v1838
        %1860 = vmatprep.subr.bf16.mxu0 0
        %1861 = vmatpush1.bf16.msra.mxu0 %v1839
        %1862 = vmatprep.subr.bf16.mxu0 0
        %1863 = vmatpush1.bf16.msra.mxu0 %v1840
        %1864 = vmatprep.subr.bf16.mxu0 0
        %1865 = vmatpush1.bf16.msra.mxu0 %v1841
        %1866 = vmatprep.subr.bf16.mxu0 0
        %1867 = vmatpush1.bf16.msra.mxu0 %v1842
        %1868 = vmatprep.subr.bf16.mxu0 0
        %1869 = vmatpush1.bf16.msra.mxu0 %v1843
        %1870 = vmatprep.subr.bf16.mxu0 0
        %1871 = vmatpush1.bf16.msra.mxu0 %v1844
        %1872 = vmatprep.subr.bf16.mxu0 0
        %1873 = vmatpush1.bf16.msra.mxu0 %v1845
        %1874 = vmatprep.subr.bf16.mxu0 0
        %1875 = vmatpush1.bf16.msra.mxu0 %v1846
        %1876 = vmatprep.subr.bf16.mxu0 0
        %1877 = vmatpush1.bf16.msra.mxu0 %v1847
        %1878 = vmatprep.subr.bf16.mxu0 0
        %1879 = vmatpush1.bf16.msra.mxu0 %v1848
        %1880 = vmatprep.subr.bf16.mxu0 0
        %1881 = vmatpush1.bf16.msra.mxu0 %v1849
        %1882 = vmatprep.mubr.bf16.mxu0 %v1833
        %1883 = vmatmul.mubr.bf16.gmra.mrb[0].mxu0 %v1832
        %v1884 = vpop.f32.mrb[0].mxu0
        %v1885 = vadd.f32 0.0, %v1884
        %v1886 = vpop.f32.mrb[0].mxu0
        %v1887 = vpop.f32.mrb[0].mxu0
        %v1888 = vadd.f32 0.0, %v1887
        %v1889 = vpop.f32.mrb[0].mxu0
        %1890 = vdwg.mxu0
        %v1891 = vmax.f32 %v1885, 0.0
        %v1892 = vmax.f32 %v1888, 0.0
        %s1893 = scalar_lea.vmem %s8, 2
        %v1894 = vld [vmem:[%s1893] sm:$0x3]
        %v1895 = vpack.c.bf16 %v1892, %v1891
        %v1897 = vsel %vm751, %v1894, 0
        %1899 = vmatprep.subr.bf16.mxu0 0
        %1900 = vmatpush1.bf16.msra.mxu0 %v1895
        %1901 = vmatprep.subr.bf16.mxu0 0
        %1902 = vmatpush1.bf16.msra.mxu0 0
        %1903 = vmatprep.subr.bf16.mxu0 0
        %1904 = vmatpush1.bf16.msra.mxu0 0
        %1905 = vmatprep.subr.bf16.mxu0 0
        %1906 = vmatpush1.bf16.msra.mxu0 0
        %1907 = vmatprep.subr.bf16.mxu0 0
        %1908 = vmatpush1.bf16.msra.mxu0 0
        %1909 = vmatprep.subr.bf16.mxu0 0
        %1910 = vmatpush1.bf16.msra.mxu0 0
        %1911 = vmatprep.subr.bf16.mxu0 0
        %1912 = vmatpush1.bf16.msra.mxu0 0
        %1913 = vmatprep.subr.bf16.mxu0 0
        %1914 = vmatpush1.bf16.msra.mxu0 0
        %1915 = vmatprep.subr.bf16.mxu0 0
        %1916 = vmatpush1.bf16.msra.mxu0 0
        %1917 = vmatprep.subr.bf16.mxu0 0
        %1918 = vmatpush1.bf16.msra.mxu0 0
        %1919 = vmatprep.subr.bf16.mxu0 0
        %1920 = vmatpush1.bf16.msra.mxu0 0
        %1921 = vmatprep.subr.bf16.mxu0 0
        %1922 = vmatpush1.bf16.msra.mxu0 0
        %1923 = vmatprep.subr.bf16.mxu0 0
        %1924 = vmatpush1.bf16.msra.mxu0 0
        %1925 = vmatprep.subr.bf16.mxu0 0
        %1926 = vmatpush1.bf16.msra.mxu0 0
        %1927 = vmatprep.subr.bf16.mxu0 0
        %1928 = vmatpush1.bf16.msra.mxu0 0
        %1929 = vmatprep.subr.bf16.mxu0 0
        %1930 = vmatpush1.bf16.msra.mxu0 0
        %1931 = vmatprep.mubr.bf16.mxu0 0
        %1932 = vmatmul.mubr.bf16.gmra.mrb[0].mxu0 %v1897
        %v1933 = vpop.f32.mrb[0].mxu0
        %v1934 = vadd.f32 0.0, %v1933
        %v1935 = vpop.f32.mrb[0].mxu0
        %v1936 = vpop.f32.mrb[0].mxu0
        %v1937 = vpop.f32.mrb[0].mxu0
        %1938 = vdwg.mxu0
        %v1940 = vsel %vm751, %v1337, 0
        %1942 = vmatprep.subr.bf16.mxu0 0
        %1943 = vmatpush1.bf16.msra.mxu0 %v1338
        %1944 = vmatprep.subr.bf16.mxu0 0
        %1945 = vmatpush1.bf16.msra.mxu0 0
        %1946 = vmatprep.subr.bf16.mxu0 0
        %1947 = vmatpush1.bf16.msra.mxu0 0
        %1948 = vmatprep.subr.bf16.mxu0 0
        %1949 = vmatpush1.bf16.msra.mxu0 0
        %1950 = vmatprep.subr.bf16.mxu0 0
        %1951 = vmatpush1.bf16.msra.mxu0 0
        %1952 = vmatprep.subr.bf16.mxu0 0
        %1953 = vmatpush1.bf16.msra.mxu0 0
        %1954 = vmatprep.subr.bf16.mxu0 0
        %1955 = vmatpush1.bf16.msra.mxu0 0
        %1956 = vmatprep.subr.bf16.mxu0 0
        %1957 = vmatpush1.bf16.msra.mxu0 0
        %1958 = vmatprep.subr.bf16.mxu0 0
        %1959 = vmatpush1.bf16.msra.mxu0 0
        %1960 = vmatprep.subr.bf16.mxu0 0
        %1961 = vmatpush1.bf16.msra.mxu0 0
        %1962 = vmatprep.subr.bf16.mxu0 0
        %1963 = vmatpush1.bf16.msra.mxu0 0
        %1964 = vmatprep.subr.bf16.mxu0 0
        %1965 = vmatpush1.bf16.msra.mxu0 0
        %1966 = vmatprep.subr.bf16.mxu0 0
        %1967 = vmatpush1.bf16.msra.mxu0 0
        %1968 = vmatprep.subr.bf16.mxu0 0
        %1969 = vmatpush1.bf16.msra.mxu0 0
        %1970 = vmatprep.subr.bf16.mxu0 0
        %1971 = vmatpush1.bf16.msra.mxu0 0
        %1972 = vmatprep.subr.bf16.mxu0 0
        %1973 = vmatpush1.bf16.msra.mxu0 0
        %1974 = vmatprep.mubr.bf16.mxu0 0
        %1975 = vmatmul.mubr.bf16.gmra.mrb[0].mxu0 %v1940
        %v1976 = vpop.f32.mrb[0].mxu0
        %v1977 = vadd.f32 %v1934, %v1976
        %v1978 = vpop.f32.mrb[0].mxu0
        %v1979 = vpop.f32.mrb[0].mxu0
        %v1980 = vpop.f32.mrb[0].mxu0
        %1981 = vdwg.mxu0
        %v1982 = vld [vmem:[%s9] sm:$0xf]
        %1984 = vset.pattern.permute.xlu0 0
        %1985 = vperm.xlu0 %1984, %v1982
        %v1986 = vpop.permute.xlu0 %1985
        %v1988 = vadd.f32 %v1977, %v1986
        %1989 = vst [vmem:[%s428] sm:$0xf] %v1988
        %s1990 = sand.u32 %s276, 1
        %s1991 = scalar_lea.sflag [#allocation4], %s1990
        %s1992 = sand.u32 %s276, 1
        %s1993 = smul.addr %s1992, 4
        %s1994 = scalar_lea.vmem [#allocation5], %s1993
        // Predicated region
        $region65: #{tpu_custom_call.1} parent=59 // pred_check
          %p1995 = pneg %p286
        $region66: #{tpu_custom_call.1} parent=59 // pred_check_branch
          %1997 = sbr.rel (%p1995) target = $region68
        $region67: #{tpu_custom_call.1} parent=59 // pred_region
          %s1999 = ssub.s32 64, 64
          %2000 = vsyncadd %s1991, %s1999
          %s2001 = smul.addr %s31, 2
          %s2002 = sadd.s32 %s32, %s2001
          %s2003 = smul.addr %s2002, 64
          %s2004 = scalar_lea.hbm %s10, %s2003
          %s2006 = sshll.u32 %s1994, 4
          %s2007 = int_to_ptr.vmem [resolvable:$true] %s2006
          %2009 = dma.vmem_to_hbm [thread:$0]  %s2007, 64, %s2004, %s1991
        $region68: #{tpu_custom_call.1} parent=59 // pred_fallthru
          _
      $region60: #{tpu_custom_call.1} parent=5 // pred_fallthru
        _
      %p2010 = scmp.le.s32.totalorder 2, %s22
      // Predicated region
      $region69: #{tpu_custom_call.1} parent=5 // pred_check
        %p2011 = pneg %p2010
      $region70: #{tpu_custom_call.1} parent=5 // pred_check_branch
        %2013 = sbr.rel (%p2011) target = $region72
      $region71: #{tpu_custom_call.1} parent=5 // pred_region
        %s2014 = ssub.s32 %s22, 2
        // Predicated region
        $region73: #{tpu_custom_call.1} parent=71 // pred_check
          %p2015 = pneg %p292
        $region74: #{tpu_custom_call.1} parent=71 // pred_check_branch
          %2017 = sbr.rel (%p2015) target = $region76
        $region75: #{tpu_custom_call.1} parent=71 // pred_region
          %s2018 = sand.u32 %s277, 1
          %s2019 = scalar_lea.sflag [#allocation4], %s2018
          %s2020 = sand.u32 %s277, 1
          %s2021 = smul.addr %s2020, 4
          %s2022 = scalar_lea.vmem [#allocation5], %s2021
          %2023 = dma.done %s2019, 64
        $region76: #{tpu_custom_call.1} parent=71 // pred_fallthru
          _
      $region72: #{tpu_custom_call.1} parent=5 // pred_fallthru
        _
    $region6: #{tpu_custom_call.1} parent=1 // loop_footer
      %s26 = sadd.s32 1, %s22
    $region7: #{tpu_custom_call.1} parent=1 // loop_footer_branch
      %21 = sbr.rel target = $region3
    $region8: #{tpu_custom_call.1} parent=1 // loop_exit
      _
    %2024 = vsyncpa [#allocation3], 1
    %s2025 = scalar_lea.sflag [#allocation3], 1
    %2026 = vsyncpa %s2025, 1
    %2027 = vsyncpa [#allocation4], 1
    %s2028 = scalar_lea.sflag [#allocation4], 1
    %2029 = vsyncpa %s2028, 1

</llo_original>
